<compile_context>
chip_gen: v7x
topology: tpu7x:2x2x1
jax: 0.10.0
libtpu: 0.0.40
codegen_flags: <defaults>
</compile_context>

<pallas_src>
import numpy as np
import jax
import jax.numpy as jnp
from jax import lax
from jax.experimental import pallas as pl
from jax.experimental.pallas import tpu as pltpu

# ---------------- model hyper-parameters (small, consistent with the module) --
B = 2            # batch
T = 16           # max_seq_len
NLAYERS = 13     # wav2vec2 layers captured by hooks
DW = 768         # wav2vec2 hidden dim
DE = 25          # eGeMAPS LLD dim
DE_PAD = 128     # eGeMAPS feature dim padded to a full lane width
DIM1 = 32        # dim1: neurons of the eGeMAPS fc layer
NOUT = 7         # output classes
NOUT_PAD = 128   # lane-dense padded output width

# T-tile size (bf16 feature tile -> keep a multiple of 16 sublanes).
TT = T if T <= 256 else 256
assert T % TT == 0 and TT % 16 == 0

# Row offsets inside the packed weight slab (all multiples of 8 -> aligned views)
W1_OFF = 0                     # (768,128) w1'  (norm folded)
WE_OFF = W1_OFF + DW           # (128,128) we'  (norm folded, zero-padded rows/cols)
W2W_OFF = WE_OFF + 128         # (128,128) w2 (w2v2 half)
W2E_OFF = W2W_OFF + 128        # (128,128) w2 (eGeMAPS half, zero-padded rows)
WO_OFF = W2E_OFF + 128         # (128,128) output weight (zero-padded cols)
BIAS_OFF = WO_OFF + 128        # (8,128)   rows: [b1'; be'; b2; bo; 0;0;0;0]
W_ROWS = BIAS_OFF + 8


def _head_kernel(len_ref, invl_ref, wtd_ref,   # SMEM scalar-prefetch: (B,),(B,),(13,)
                 x13_ref,                      # (NLAYERS, TT, DW) bf16
                 eg_ref,                       # (TT, DE_PAD) f32
                 w_ref,                        # (W_ROWS, 128) f32 packed weight slab
                 out_ref,                      # (8, NOUT_PAD) f32
                 xw_acc,                       # (TT, DW) f32 scratch
                 pool_acc):                    # (1, 128)  f32 scratch
    b = pl.program_id(0)
    t = pl.program_id(1)

    @pl.when(t == 0)
    def _():
        pool_acc[...] = jnp.zeros_like(pool_acc)

    # ---- (3) wtd_avg: weighted sum over 13 layers (bf16 in, f32 accumulate) ----
    xw_acc[...] = wtd_ref[0] * x13_ref[0]

    def _acc_layer(l, carry):
        xw_acc[...] += wtd_ref[l] * x13_ref[l]
        return carry

    lax.fori_loop(1, NLAYERS, _acc_layer, 0, unroll=True)

    bias = w_ref[BIAS_OFF:BIAS_OFF + 8, :]      # (8,128): [b1'; be'; b2; bo; ...]

    # ---- (2,4) Linear(768->128) + ReLU (global norm folded into w1'/b1') ----
    hw = jnp.maximum(
        jnp.dot(xw_acc[...], w_ref[W1_OFF:W1_OFF + DW, :],
                preferred_element_type=jnp.float32) + bias[0:1, :], 0.0)

    # ---- (2,5) eGeMAPS Linear(25->dim1) + ReLU (lane-padded to 128) ----
    he = jnp.maximum(
        jnp.dot(eg_ref[...], w_ref[WE_OFF:WE_OFF + 128, :],
                preferred_element_type=jnp.float32) + bias[1:2, :], 0.0)

    # ---- (6) concat conv expressed as split matmuls + ReLU ----
    h2 = jnp.maximum(
        jnp.dot(hw, w_ref[W2W_OFF:W2W_OFF + 128, :], preferred_element_type=jnp.float32)
        + jnp.dot(he, w_ref[W2E_OFF:W2E_OFF + 128, :], preferred_element_type=jnp.float32)
        + bias[2:3, :], 0.0)

    # ---- (7) masked mean pooling: mask * (1/L) built from SMEM scalars ----
    fidx = lax.broadcasted_iota(jnp.int32, (TT, 1), 0) + t * TT
    poolw = jnp.where(fidx < len_ref[b], invl_ref[b], 0.0)       # (TT,1) f32
    pool_acc[...] += jnp.sum(h2 * poolw, axis=0, keepdims=True)  # (1,128)

    # ---- (8) output Linear(128->7), lane-padded, at the last T tile ----
    @pl.when(t == pl.num_programs(1) - 1)
    def _():
        res = (jnp.dot(pool_acc[...], w_ref[WO_OFF:WO_OFF + 128, :],
                       preferred_element_type=jnp.float32) + bias[3:4, :])
        out_ref[...] = jnp.broadcast_to(res, (8, NOUT_PAD))


@jax.jit
def head_forward(w2v2, eg, lengths, params):
    """w2v2: (B,13,T,768) f32; eg: (B,T,25) f32; lengths: (B,) int32."""
    (wtd, mw, sw, me, se, w1, b1, we, be, w2w, w2e, b2, wo, bo) = params

    # ---- fold global normalization into the first-layer weights ----
    wsum = jnp.sum(wtd)
    w1p = w1 * (1.0 / sw)[0][:, None]                  # (768,128)
    b1p = b1 - (wsum * mw) @ w1p                       # (1,128)
    wep = we * (1.0 / se)[0][:, None]                  # (25,32)
    bep = be - me @ wep                                # (1,32)

    # ---- pack all 128-lane weights/biases into one row-stacked VMEM slab ----
    wep_pad = jnp.pad(wep, ((0, DE_PAD - DE), (0, 128 - DIM1)))
    w2e_pad = jnp.pad(w2e, ((0, 128 - DIM1), (0, 0)))
    wo_pad = jnp.pad(wo, ((0, 0), (0, NOUT_PAD - NOUT)))
    bias8 = jnp.concatenate(
        [b1p,
         jnp.pad(bep, ((0, 0), (0, 128 - DIM1))),
         b2,
         jnp.pad(bo, ((0, 0), (0, NOUT_PAD - NOUT))),
         jnp.zeros((4, 128), jnp.float32)], axis=0)     # (8,128)
    w_slab = jnp.concatenate([w1p, wep_pad, w2w, w2e_pad, wo_pad, bias8], axis=0)

    # ---- feature prep: bf16 wav2vec2 stack (dominant HBM stream), padded eG ----
    x13 = w2v2.astype(jnp.bfloat16)                          # (B,13,T,768)
    eg_p = jnp.pad(eg, ((0, 0), (0, 0), (0, DE_PAD - DE)))   # (B,T,128)
    lengths_i = lengths.astype(jnp.int32)
    inv_len = 1.0 / jnp.maximum(lengths_i, 1).astype(jnp.float32)
    wtd_flat = wtd.reshape(NLAYERS).astype(jnp.float32)

    grid_spec = pltpu.PrefetchScalarGridSpec(
        num_scalar_prefetch=3,                               # lengths, 1/L, wtd
        grid=(B, T // TT),
        in_specs=[
            pl.BlockSpec((None, NLAYERS, TT, DW), lambda b, t, *_: (b, 0, t, 0)),
            pl.BlockSpec((None, TT, DE_PAD), lambda b, t, *_: (b, t, 0)),
            pl.BlockSpec((W_ROWS, 128), lambda b, t, *_: (0, 0)),
        ],
        out_specs=pl.BlockSpec((None, 8, NOUT_PAD), lambda b, t, *_: (b, 0, 0)),
        scratch_shapes=[pltpu.VMEM((TT, DW), jnp.float32),   # layer-sum accumulator
                        pltpu.VMEM((1, 128), jnp.float32)],  # pooled-sum accumulator
    )

    out = pl.pallas_call(
        _head_kernel,
        out_shape=jax.ShapeDtypeStruct((B, 8, NOUT_PAD), jnp.float32),
        grid_spec=grid_spec,
        compiler_params=pltpu.CompilerParams(
            dimension_semantics=("parallel", "arbitrary"),   # batch across TCs on v7x
            vmem_limit_bytes=32 * 1024 * 1024),
    )(lengths_i, inv_len, wtd_flat, x13, eg_p, w_slab)

    return out[:, 0, :NOUT]


def reference_forward(w2v2, eg, lengths, params):
    """Pure-JAX f32 reference following the original PyTorch formulation."""
    (wtd, mw, sw, me, se, w1, b1, we, be, w2w, w2e, b2, wo, bo) = params
    outs = []
    for i in range(B):
        L = lengths[i]
        fm = (jnp.arange(T)[:, None] < L)                                   # (T,1)
        x13 = w2v2[i]                                                       # (13,T,768)
        x13n = jnp.where(fm[None], (x13 - mw[None]) / sw[None], x13)
        egn = jnp.where(fm, (eg[i] - me) / se, eg[i])                       # (T,25)
        xw = jnp.sum(x13n * wtd.reshape(NLAYERS, 1, 1), axis=0)             # (T,768)
        hw = jax.nn.relu(xw @ w1 + b1)
        he = jax.nn.relu(egn @ we + be)
        h2 = jax.nn.relu(hw @ w2w + he @ w2e + b2)
        Lc = jnp.maximum(L, 1).astype(jnp.float32)
        pooled = jnp.sum(h2 * fm.astype(jnp.float32), axis=0) / Lc
        outs.append(pooled @ wo + bo[0])
    return jnp.stack(outs)


def make_params(key):
    ks = jax.random.split(key, 11)
    scale = 0.02
    # wtd_avg: init is constant 1 in PyTorch; perturb slightly (trainable param)
    wtd = 1.0 + 0.05 * jax.random.normal(ks[10], (1, NLAYERS), jnp.float32)
    # global-norm stats
    mw = scale * jax.random.normal(ks[0], (1, DW), jnp.float32)
    sw = 1.0 + 0.1 * jnp.abs(jax.random.normal(ks[1], (1, DW), jnp.float32))
    me = scale * jax.random.normal(ks[2], (1, DE), jnp.float32)
    se = 1.0 + 0.1 * jnp.abs(jax.random.normal(ks[3], (1, DE), jnp.float32))
    # pt_wise_conv1d_1_w2v2: Conv2d(1,128,(1,768)) == Linear(768,128)
    w1 = scale * jax.random.normal(ks[4], (DW, 128), jnp.float32)
    b1 = scale * jax.random.normal(ks[5], (1, 128), jnp.float32)
    # pt_wise_conv1d_1_eGeMAPS: Conv2d(1,dim1,(1,25)) == Linear(25,dim1)
    we = scale * jax.random.normal(ks[6], (DE, DIM1), jnp.float32)
    be = scale * jax.random.normal(ks[7], (1, DIM1), jnp.float32)
    # pt_wise_conv1d_2: Conv2d(1,128,(1,dim1+128)) split into (128,128)+(dim1,128)
    kk = jax.random.split(ks[8], 4)
    w2w = scale * jax.random.normal(kk[0], (128, 128), jnp.float32)
    w2e = scale * jax.random.normal(kk[1], (DIM1, 128), jnp.float32)
    b2 = scale * jax.random.normal(kk[2], (1, 128), jnp.float32)
    # out_layer: Linear(128,7)
    ko = jax.random.split(ks[9], 2)
    wo = scale * jax.random.normal(ko[0], (128, NOUT), jnp.float32)
    bo = scale * jax.random.normal(ko[1], (1, NOUT), jnp.float32)
    return (wtd, mw, sw, me, se, w1, b1, we, be, w2w, w2e, b2, wo, bo)


if __name__ == "__main__":
    key = jax.random.PRNGKey(0)
    k_feat, k_eg, k_par = jax.random.split(key, 3)

    # Synthetic features standing in for the frozen wav2vec2 / opensmile outputs.
    w2v2_features = jax.random.normal(k_feat, (B, NLAYERS, T, DW), jnp.float32)
    eg_features = jax.random.normal(k_eg, (B, T, DE), jnp.float32)
    lengths = jnp.array([12, 16], dtype=jnp.int32)   # valid frames per sample

    # zero the padding frames (as the PyTorch buffers are zero-initialized)
    tmask = (jnp.arange(T)[None, :] < lengths[:, None]).astype(jnp.float32)
    w2v2_features = w2v2_features * tmask[:, None, :, None]
    eg_features = eg_features * tmask[:, :, None]

    params = make_params(k_par)

    out = jax.block_until_ready(
        head_forward(w2v2_features, eg_features, lengths, params))

    ref = reference_forward(w2v2_features, eg_features, lengths, params)
    # Tolerance loosened vs. the pure-f32 version: wav2vec2 features are shipped
    # to the kernel as bf16 (HBM-traffic optimization), accumulation stays f32.
    np.testing.assert_allclose(np.asarray(out), np.asarray(ref), rtol=5e-2, atol=3e-3)
    assert out.shape == (B, NOUT)
    print("KERNEL_OK")
</pallas_src>

<mosaic_0001>
module attributes {stable_mosaic.version = 11 : i64} {
  func.func @_head_kernel(%arg0: i32, %arg1: i32, %arg2: memref<2xi32, #tpu.memory_space<smem>>, %arg3: memref<2xf32, #tpu.memory_space<smem>>, %arg4: memref<13xf32, #tpu.memory_space<smem>>, %arg5: memref<1x13x16x768xbf16, #tpu.memory_space<vmem>>, %arg6: memref<1x16x128xf32, #tpu.memory_space<vmem>>, %arg7: memref<1288x128xf32, #tpu.memory_space<vmem>>, %arg8: memref<1x8x128xf32, #tpu.memory_space<vmem>>, %arg9: memref<16x768xf32, #tpu.memory_space<vmem>>, %arg10: memref<1x128xf32, #tpu.memory_space<vmem>>) attributes {dimension_semantics = [#tpu.dimension_semantics<parallel>, #tpu.dimension_semantics<arbitrary>], iteration_bounds = array<i64: 2, 1>, scalar_prefetch = 3 : i64, scratch_operands = 2 : i64, tpu.core_type = #tpu.core_type<tc>, window_params = [{transform_indices = @transform_0, window_bounds = array<i64: 1, 13, 16, 768>}, {transform_indices = @transform_1, window_bounds = array<i64: 1, 16, 128>}, {pipeline_mode = #tpu.pipeline_mode<synchronous>, transform_indices = @transform_2, window_bounds = array<i64: 1288, 128>}, {transform_indices = @transform_3, window_bounds = array<i64: 1, 8, 128>}]} {
    %c0_i32 = arith.constant 0 : i32
    %0 = arith.cmpi eq, %arg1, %c0_i32 : i32
    %1 = arith.extui %0 : i1 to i32
    %c0_i32_0 = arith.constant 0 : i32
    %2 = arith.cmpi ne, %1, %c0_i32_0 : i32
    scf.if %2 {
      %cst_117 = arith.constant 0.000000e+00 : f32
      %193 = vector.broadcast %cst_117 : f32 to vector<1x128xf32>
      %c0_118 = arith.constant 0 : index
      %c0_119 = arith.constant 0 : index
      %194 = vector.load %arg10[%c0_118, %c0_119] : memref<1x128xf32, #tpu.memory_space<vmem>>, vector<1x128xf32>
      tpu.vector_store %arg10[%c0_118, %c0_119], %193 {strides = array<i32>} : memref<1x128xf32, #tpu.memory_space<vmem>>, vector<1x128xf32>,
    } else {
    }
    %c0 = arith.constant 0 : index
    %3 = memref.load %arg4[%c0] : memref<13xf32, #tpu.memory_space<smem>>
    %c0_1 = arith.constant 0 : index
    %c0_2 = arith.constant 0 : index
    %c0_3 = arith.constant 0 : index
    %c0_4 = arith.constant 0 : index
    %4 = vector.load %arg5[%c0_1, %c0_2, %c0_3, %c0_4] : memref<1x13x16x768xbf16, #tpu.memory_space<vmem>>, vector<1x1x16x768xbf16>
    %5 = vector.shape_cast %4 : vector<1x1x16x768xbf16> to vector<16x768xbf16>
    %6 = arith.extf %5 : vector<16x768xbf16> to vector<16x768xf32>
    %7 = vector.broadcast %3 : f32 to vector<16x768xf32>
    %8 = arith.mulf %7, %6 : vector<16x768xf32>
    %c0_5 = arith.constant 0 : index
    %c0_6 = arith.constant 0 : index
    %9 = vector.load %arg9[%c0_5, %c0_6] : memref<16x768xf32, #tpu.memory_space<vmem>>, vector<16x768xf32>
    tpu.vector_store %arg9[%c0_5, %c0_6], %8 {strides = array<i32>} : memref<16x768xf32, #tpu.memory_space<vmem>>, vector<16x768xf32>,
    %c1_i32 = arith.constant 1 : i32
    %c0_7 = arith.constant 0 : index
    %c0_8 = arith.constant 0 : index
    %10 = vector.load %arg9[%c0_7, %c0_8] : memref<16x768xf32, #tpu.memory_space<vmem>>, vector<16x768xf32>
    %11 = arith.index_cast %c1_i32 : i32 to index
    %12 = memref.load %arg4[%11] : memref<13xf32, #tpu.memory_space<smem>>
    %c0_9 = arith.constant 0 : index
    %13 = arith.index_cast %c1_i32 : i32 to index
    %c0_10 = arith.constant 0 : index
    %c0_11 = arith.constant 0 : index
    %14 = vector.load %arg5[%c0_9, %13, %c0_10, %c0_11] : memref<1x13x16x768xbf16, #tpu.memory_space<vmem>>, vector<1x1x16x768xbf16>
    %15 = vector.shape_cast %14 : vector<1x1x16x768xbf16> to vector<16x768xbf16>
    %16 = arith.extf %15 : vector<16x768xbf16> to vector<16x768xf32>
    %17 = vector.broadcast %12 : f32 to vector<16x768xf32>
    %18 = arith.mulf %17, %16 : vector<16x768xf32>
    %19 = arith.addf %10, %18 : vector<16x768xf32>
    %c0_12 = arith.constant 0 : index
    %c0_13 = arith.constant 0 : index
    %20 = vector.load %arg9[%c0_12, %c0_13] : memref<16x768xf32, #tpu.memory_space<vmem>>, vector<16x768xf32>
    tpu.vector_store %arg9[%c0_12, %c0_13], %19 {strides = array<i32>} : memref<16x768xf32, #tpu.memory_space<vmem>>, vector<16x768xf32>,
    %c2_i32 = arith.constant 2 : i32
    %c0_14 = arith.constant 0 : index
    %c0_15 = arith.constant 0 : index
    %21 = vector.load %arg9[%c0_14, %c0_15] : memref<16x768xf32, #tpu.memory_space<vmem>>, vector<16x768xf32>
    %22 = arith.index_cast %c2_i32 : i32 to index
    %23 = memref.load %arg4[%22] : memref<13xf32, #tpu.memory_space<smem>>
    %c0_16 = arith.constant 0 : index
    %24 = arith.index_cast %c2_i32 : i32 to index
    %c0_17 = arith.constant 0 : index
    %c0_18 = arith.constant 0 : index
    %25 = vector.load %arg5[%c0_16, %24, %c0_17, %c0_18] : memref<1x13x16x768xbf16, #tpu.memory_space<vmem>>, vector<1x1x16x768xbf16>
    %26 = vector.shape_cast %25 : vector<1x1x16x768xbf16> to vector<16x768xbf16>
    %27 = arith.extf %26 : vector<16x768xbf16> to vector<16x768xf32>
    %28 = vector.broadcast %23 : f32 to vector<16x768xf32>
    %29 = arith.mulf %28, %27 : vector<16x768xf32>
    %30 = arith.addf %21, %29 : vector<16x768xf32>
    %c0_19 = arith.constant 0 : index
    %c0_20 = arith.constant 0 : index
    %31 = vector.load %arg9[%c0_19, %c0_20] : memref<16x768xf32, #tpu.memory_space<vmem>>, vector<16x768xf32>
    tpu.vector_store %arg9[%c0_19, %c0_20], %30 {strides = array<i32>} : memref<16x768xf32, #tpu.memory_space<vmem>>, vector<16x768xf32>,
    %c3_i32 = arith.constant 3 : i32
    %c0_21 = arith.constant 0 : index
    %c0_22 = arith.constant 0 : index
    %32 = vector.load %arg9[%c0_21, %c0_22] : memref<16x768xf32, #tpu.memory_space<vmem>>, vector<16x768xf32>
    %33 = arith.index_cast %c3_i32 : i32 to index
    %34 = memref.load %arg4[%33] : memref<13xf32, #tpu.memory_space<smem>>
    %c0_23 = arith.constant 0 : index
    %35 = arith.index_cast %c3_i32 : i32 to index
    %c0_24 = arith.constant 0 : index
    %c0_25 = arith.constant 0 : index
    %36 = vector.load %arg5[%c0_23, %35, %c0_24, %c0_25] : memref<1x13x16x768xbf16, #tpu.memory_space<vmem>>, vector<1x1x16x768xbf16>
    %37 = vector.shape_cast %36 : vector<1x1x16x768xbf16> to vector<16x768xbf16>
    %38 = arith.extf %37 : vector<16x768xbf16> to vector<16x768xf32>
    %39 = vector.broadcast %34 : f32 to vector<16x768xf32>
    %40 = arith.mulf %39, %38 : vector<16x768xf32>
    %41 = arith.addf %32, %40 : vector<16x768xf32>
    %c0_26 = arith.constant 0 : index
    %c0_27 = arith.constant 0 : index
    %42 = vector.load %arg9[%c0_26, %c0_27] : memref<16x768xf32, #tpu.memory_space<vmem>>, vector<16x768xf32>
    tpu.vector_store %arg9[%c0_26, %c0_27], %41 {strides = array<i32>} : memref<16x768xf32, #tpu.memory_space<vmem>>, vector<16x768xf32>,
    %c4_i32 = arith.constant 4 : i32
    %c0_28 = arith.constant 0 : index
    %c0_29 = arith.constant 0 : index
    %43 = vector.load %arg9[%c0_28, %c0_29] : memref<16x768xf32, #tpu.memory_space<vmem>>, vector<16x768xf32>
    %44 = arith.index_cast %c4_i32 : i32 to index
    %45 = memref.load %arg4[%44] : memref<13xf32, #tpu.memory_space<smem>>
    %c0_30 = arith.constant 0 : index
    %46 = arith.index_cast %c4_i32 : i32 to index
    %c0_31 = arith.constant 0 : index
    %c0_32 = arith.constant 0 : index
    %47 = vector.load %arg5[%c0_30, %46, %c0_31, %c0_32] : memref<1x13x16x768xbf16, #tpu.memory_space<vmem>>, vector<1x1x16x768xbf16>
    %48 = vector.shape_cast %47 : vector<1x1x16x768xbf16> to vector<16x768xbf16>
    %49 = arith.extf %48 : vector<16x768xbf16> to vector<16x768xf32>
    %50 = vector.broadcast %45 : f32 to vector<16x768xf32>
    %51 = arith.mulf %50, %49 : vector<16x768xf32>
    %52 = arith.addf %43, %51 : vector<16x768xf32>
    %c0_33 = arith.constant 0 : index
    %c0_34 = arith.constant 0 : index
    %53 = vector.load %arg9[%c0_33, %c0_34] : memref<16x768xf32, #tpu.memory_space<vmem>>, vector<16x768xf32>
    tpu.vector_store %arg9[%c0_33, %c0_34], %52 {strides = array<i32>} : memref<16x768xf32, #tpu.memory_space<vmem>>, vector<16x768xf32>,
    %c5_i32 = arith.constant 5 : i32
    %c0_35 = arith.constant 0 : index
    %c0_36 = arith.constant 0 : index
    %54 = vector.load %arg9[%c0_35, %c0_36] : memref<16x768xf32, #tpu.memory_space<vmem>>, vector<16x768xf32>
    %55 = arith.index_cast %c5_i32 : i32 to index
    %56 = memref.load %arg4[%55] : memref<13xf32, #tpu.memory_space<smem>>
    %c0_37 = arith.constant 0 : index
    %57 = arith.index_cast %c5_i32 : i32 to index
    %c0_38 = arith.constant 0 : index
    %c0_39 = arith.constant 0 : index
    %58 = vector.load %arg5[%c0_37, %57, %c0_38, %c0_39] : memref<1x13x16x768xbf16, #tpu.memory_space<vmem>>, vector<1x1x16x768xbf16>
    %59 = vector.shape_cast %58 : vector<1x1x16x768xbf16> to vector<16x768xbf16>
    %60 = arith.extf %59 : vector<16x768xbf16> to vector<16x768xf32>
    %61 = vector.broadcast %56 : f32 to vector<16x768xf32>
    %62 = arith.mulf %61, %60 : vector<16x768xf32>
    %63 = arith.addf %54, %62 : vector<16x768xf32>
    %c0_40 = arith.constant 0 : index
    %c0_41 = arith.constant 0 : index
    %64 = vector.load %arg9[%c0_40, %c0_41] : memref<16x768xf32, #tpu.memory_space<vmem>>, vector<16x768xf32>
    tpu.vector_store %arg9[%c0_40, %c0_41], %63 {strides = array<i32>} : memref<16x768xf32, #tpu.memory_space<vmem>>, vector<16x768xf32>,
    %c6_i32 = arith.constant 6 : i32
    %c0_42 = arith.constant 0 : index
    %c0_43 = arith.constant 0 : index
    %65 = vector.load %arg9[%c0_42, %c0_43] : memref<16x768xf32, #tpu.memory_space<vmem>>, vector<16x768xf32>
    %66 = arith.index_cast %c6_i32 : i32 to index
    %67 = memref.load %arg4[%66] : memref<13xf32, #tpu.memory_space<smem>>
    %c0_44 = arith.constant 0 : index
    %68 = arith.index_cast %c6_i32 : i32 to index
    %c0_45 = arith.constant 0 : index
    %c0_46 = arith.constant 0 : index
    %69 = vector.load %arg5[%c0_44, %68, %c0_45, %c0_46] : memref<1x13x16x768xbf16, #tpu.memory_space<vmem>>, vector<1x1x16x768xbf16>
    %70 = vector.shape_cast %69 : vector<1x1x16x768xbf16> to vector<16x768xbf16>
    %71 = arith.extf %70 : vector<16x768xbf16> to vector<16x768xf32>
    %72 = vector.broadcast %67 : f32 to vector<16x768xf32>
    %73 = arith.mulf %72, %71 : vector<16x768xf32>
    %74 = arith.addf %65, %73 : vector<16x768xf32>
    %c0_47 = arith.constant 0 : index
    %c0_48 = arith.constant 0 : index
    %75 = vector.load %arg9[%c0_47, %c0_48] : memref<16x768xf32, #tpu.memory_space<vmem>>, vector<16x768xf32>
    tpu.vector_store %arg9[%c0_47, %c0_48], %74 {strides = array<i32>} : memref<16x768xf32, #tpu.memory_space<vmem>>, vector<16x768xf32>,
    %c7_i32 = arith.constant 7 : i32
    %c0_49 = arith.constant 0 : index
    %c0_50 = arith.constant 0 : index
    %76 = vector.load %arg9[%c0_49, %c0_50] : memref<16x768xf32, #tpu.memory_space<vmem>>, vector<16x768xf32>
    %77 = arith.index_cast %c7_i32 : i32 to index
    %78 = memref.load %arg4[%77] : memref<13xf32, #tpu.memory_space<smem>>
    %c0_51 = arith.constant 0 : index
    %79 = arith.index_cast %c7_i32 : i32 to index
    %c0_52 = arith.constant 0 : index
    %c0_53 = arith.constant 0 : index
    %80 = vector.load %arg5[%c0_51, %79, %c0_52, %c0_53] : memref<1x13x16x768xbf16, #tpu.memory_space<vmem>>, vector<1x1x16x768xbf16>
    %81 = vector.shape_cast %80 : vector<1x1x16x768xbf16> to vector<16x768xbf16>
    %82 = arith.extf %81 : vector<16x768xbf16> to vector<16x768xf32>
    %83 = vector.broadcast %78 : f32 to vector<16x768xf32>
    %84 = arith.mulf %83, %82 : vector<16x768xf32>
    %85 = arith.addf %76, %84 : vector<16x768xf32>
    %c0_54 = arith.constant 0 : index
    %c0_55 = arith.constant 0 : index
    %86 = vector.load %arg9[%c0_54, %c0_55] : memref<16x768xf32, #tpu.memory_space<vmem>>, vector<16x768xf32>
    tpu.vector_store %arg9[%c0_54, %c0_55], %85 {strides = array<i32>} : memref<16x768xf32, #tpu.memory_space<vmem>>, vector<16x768xf32>,
    %c8_i32 = arith.constant 8 : i32
    %c0_56 = arith.constant 0 : index
    %c0_57 = arith.constant 0 : index
    %87 = vector.load %arg9[%c0_56, %c0_57] : memref<16x768xf32, #tpu.memory_space<vmem>>, vector<16x768xf32>
    %88 = arith.index_cast %c8_i32 : i32 to index
    %89 = memref.load %arg4[%88] : memref<13xf32, #tpu.memory_space<smem>>
    %c0_58 = arith.constant 0 : index
    %90 = arith.index_cast %c8_i32 : i32 to index
    %c0_59 = arith.constant 0 : index
    %c0_60 = arith.constant 0 : index
    %91 = vector.load %arg5[%c0_58, %90, %c0_59, %c0_60] : memref<1x13x16x768xbf16, #tpu.memory_space<vmem>>, vector<1x1x16x768xbf16>
    %92 = vector.shape_cast %91 : vector<1x1x16x768xbf16> to vector<16x768xbf16>
    %93 = arith.extf %92 : vector<16x768xbf16> to vector<16x768xf32>
    %94 = vector.broadcast %89 : f32 to vector<16x768xf32>
    %95 = arith.mulf %94, %93 : vector<16x768xf32>
    %96 = arith.addf %87, %95 : vector<16x768xf32>
    %c0_61 = arith.constant 0 : index
    %c0_62 = arith.constant 0 : index
    %97 = vector.load %arg9[%c0_61, %c0_62] : memref<16x768xf32, #tpu.memory_space<vmem>>, vector<16x768xf32>
    tpu.vector_store %arg9[%c0_61, %c0_62], %96 {strides = array<i32>} : memref<16x768xf32, #tpu.memory_space<vmem>>, vector<16x768xf32>,
    %c9_i32 = arith.constant 9 : i32
    %c0_63 = arith.constant 0 : index
    %c0_64 = arith.constant 0 : index
    %98 = vector.load %arg9[%c0_63, %c0_64] : memref<16x768xf32, #tpu.memory_space<vmem>>, vector<16x768xf32>
    %99 = arith.index_cast %c9_i32 : i32 to index
    %100 = memref.load %arg4[%99] : memref<13xf32, #tpu.memory_space<smem>>
    %c0_65 = arith.constant 0 : index
    %101 = arith.index_cast %c9_i32 : i32 to index
    %c0_66 = arith.constant 0 : index
    %c0_67 = arith.constant 0 : index
    %102 = vector.load %arg5[%c0_65, %101, %c0_66, %c0_67] : memref<1x13x16x768xbf16, #tpu.memory_space<vmem>>, vector<1x1x16x768xbf16>
    %103 = vector.shape_cast %102 : vector<1x1x16x768xbf16> to vector<16x768xbf16>
    %104 = arith.extf %103 : vector<16x768xbf16> to vector<16x768xf32>
    %105 = vector.broadcast %100 : f32 to vector<16x768xf32>
    %106 = arith.mulf %105, %104 : vector<16x768xf32>
    %107 = arith.addf %98, %106 : vector<16x768xf32>
    %c0_68 = arith.constant 0 : index
    %c0_69 = arith.constant 0 : index
    %108 = vector.load %arg9[%c0_68, %c0_69] : memref<16x768xf32, #tpu.memory_space<vmem>>, vector<16x768xf32>
    tpu.vector_store %arg9[%c0_68, %c0_69], %107 {strides = array<i32>} : memref<16x768xf32, #tpu.memory_space<vmem>>, vector<16x768xf32>,
    %c10_i32 = arith.constant 10 : i32
    %c0_70 = arith.constant 0 : index
    %c0_71 = arith.constant 0 : index
    %109 = vector.load %arg9[%c0_70, %c0_71] : memref<16x768xf32, #tpu.memory_space<vmem>>, vector<16x768xf32>
    %110 = arith.index_cast %c10_i32 : i32 to index
    %111 = memref.load %arg4[%110] : memref<13xf32, #tpu.memory_space<smem>>
    %c0_72 = arith.constant 0 : index
    %112 = arith.index_cast %c10_i32 : i32 to index
    %c0_73 = arith.constant 0 : index
    %c0_74 = arith.constant 0 : index
    %113 = vector.load %arg5[%c0_72, %112, %c0_73, %c0_74] : memref<1x13x16x768xbf16, #tpu.memory_space<vmem>>, vector<1x1x16x768xbf16>
    %114 = vector.shape_cast %113 : vector<1x1x16x768xbf16> to vector<16x768xbf16>
    %115 = arith.extf %114 : vector<16x768xbf16> to vector<16x768xf32>
    %116 = vector.broadcast %111 : f32 to vector<16x768xf32>
    %117 = arith.mulf %116, %115 : vector<16x768xf32>
    %118 = arith.addf %109, %117 : vector<16x768xf32>
    %c0_75 = arith.constant 0 : index
    %c0_76 = arith.constant 0 : index
    %119 = vector.load %arg9[%c0_75, %c0_76] : memref<16x768xf32, #tpu.memory_space<vmem>>, vector<16x768xf32>
    tpu.vector_store %arg9[%c0_75, %c0_76], %118 {strides = array<i32>} : memref<16x768xf32, #tpu.memory_space<vmem>>, vector<16x768xf32>,
    %c11_i32 = arith.constant 11 : i32
    %c0_77 = arith.constant 0 : index
    %c0_78 = arith.constant 0 : index
    %120 = vector.load %arg9[%c0_77, %c0_78] : memref<16x768xf32, #tpu.memory_space<vmem>>, vector<16x768xf32>
    %121 = arith.index_cast %c11_i32 : i32 to index
    %122 = memref.load %arg4[%121] : memref<13xf32, #tpu.memory_space<smem>>
    %c0_79 = arith.constant 0 : index
    %123 = arith.index_cast %c11_i32 : i32 to index
    %c0_80 = arith.constant 0 : index
    %c0_81 = arith.constant 0 : index
    %124 = vector.load %arg5[%c0_79, %123, %c0_80, %c0_81] : memref<1x13x16x768xbf16, #tpu.memory_space<vmem>>, vector<1x1x16x768xbf16>
    %125 = vector.shape_cast %124 : vector<1x1x16x768xbf16> to vector<16x768xbf16>
    %126 = arith.extf %125 : vector<16x768xbf16> to vector<16x768xf32>
    %127 = vector.broadcast %122 : f32 to vector<16x768xf32>
    %128 = arith.mulf %127, %126 : vector<16x768xf32>
    %129 = arith.addf %120, %128 : vector<16x768xf32>
    %c0_82 = arith.constant 0 : index
    %c0_83 = arith.constant 0 : index
    %130 = vector.load %arg9[%c0_82, %c0_83] : memref<16x768xf32, #tpu.memory_space<vmem>>, vector<16x768xf32>
    tpu.vector_store %arg9[%c0_82, %c0_83], %129 {strides = array<i32>} : memref<16x768xf32, #tpu.memory_space<vmem>>, vector<16x768xf32>,
    %c12_i32 = arith.constant 12 : i32
    %c0_84 = arith.constant 0 : index
    %c0_85 = arith.constant 0 : index
    %131 = vector.load %arg9[%c0_84, %c0_85] : memref<16x768xf32, #tpu.memory_space<vmem>>, vector<16x768xf32>
    %132 = arith.index_cast %c12_i32 : i32 to index
    %133 = memref.load %arg4[%132] : memref<13xf32, #tpu.memory_space<smem>>
    %c0_86 = arith.constant 0 : index
    %134 = arith.index_cast %c12_i32 : i32 to index
    %c0_87 = arith.constant 0 : index
    %c0_88 = arith.constant 0 : index
    %135 = vector.load %arg5[%c0_86, %134, %c0_87, %c0_88] : memref<1x13x16x768xbf16, #tpu.memory_space<vmem>>, vector<1x1x16x768xbf16>
    %136 = vector.shape_cast %135 : vector<1x1x16x768xbf16> to vector<16x768xbf16>
    %137 = arith.extf %136 : vector<16x768xbf16> to vector<16x768xf32>
    %138 = vector.broadcast %133 : f32 to vector<16x768xf32>
    %139 = arith.mulf %138, %137 : vector<16x768xf32>
    %140 = arith.addf %131, %139 : vector<16x768xf32>
    %c0_89 = arith.constant 0 : index
    %c0_90 = arith.constant 0 : index
    %141 = vector.load %arg9[%c0_89, %c0_90] : memref<16x768xf32, #tpu.memory_space<vmem>>, vector<16x768xf32>
    tpu.vector_store %arg9[%c0_89, %c0_90], %140 {strides = array<i32>} : memref<16x768xf32, #tpu.memory_space<vmem>>, vector<16x768xf32>,
    %c12_i32_91 = arith.constant 12 : i32
    %c1280 = arith.constant 1280 : index
    %c0_92 = arith.constant 0 : index
    %142 = vector.load %arg7[%c1280, %c0_92] : memref<1288x128xf32, #tpu.memory_space<vmem>>, vector<8x128xf32>
    %c0_93 = arith.constant 0 : index
    %c0_94 = arith.constant 0 : index
    %143 = vector.load %arg9[%c0_93, %c0_94] : memref<16x768xf32, #tpu.memory_space<vmem>>, vector<16x768xf32>
    %c0_95 = arith.constant 0 : index
    %c0_96 = arith.constant 0 : index
    %144 = vector.load %arg7[%c0_95, %c0_96] : memref<1288x128xf32, #tpu.memory_space<vmem>>, vector<768x128xf32>
    %cst = arith.constant dense<0.000000e+00> : vector<16x128xf32>
    %145 = tpu.matmul %143, %144, %cst {dimension_numbers = #tpu.dot_dimension_numbers<[1], [0], [0], [1], [0, 0, 1, 1], [], []>} : vector<16x768xf32>, vector<768x128xf32>, vector<16x128xf32> -> vector<16x128xf32>
    %146 = vector.extract_strided_slice %142 {offsets = [0, 0], sizes = [1, 128], strides = [1, 1]} : vector<8x128xf32> to vector<1x128xf32>
    %147 = vector.broadcast %146 : vector<1x128xf32> to vector<16x128xf32>
    %148 = arith.addf %145, %147 : vector<16x128xf32>
    %cst_97 = arith.constant 0.000000e+00 : f32
    %149 = vector.broadcast %cst_97 : f32 to vector<16x128xf32>
    %150 = arith.maximumf %148, %149 : vector<16x128xf32>
    %c0_98 = arith.constant 0 : index
    %c0_99 = arith.constant 0 : index
    %c0_100 = arith.constant 0 : index
    %151 = vector.load %arg6[%c0_98, %c0_99, %c0_100] : memref<1x16x128xf32, #tpu.memory_space<vmem>>, vector<1x16x128xf32>
    %152 = vector.shape_cast %151 : vector<1x16x128xf32> to vector<16x128xf32>
    %c768 = arith.constant 768 : index
    %c0_101 = arith.constant 0 : index
    %153 = vector.load %arg7[%c768, %c0_101] : memref<1288x128xf32, #tpu.memory_space<vmem>>, vector<128x128xf32>
    %cst_102 = arith.constant dense<0.000000e+00> : vector<16x128xf32>
    %154 = tpu.matmul %152, %153, %cst_102 {dimension_numbers = #tpu.dot_dimension_numbers<[1], [0], [0], [1], [0, 0, 1, 1], [], []>} : vector<16x128xf32>, vector<128x128xf32>, vector<16x128xf32> -> vector<16x128xf32>
    %155 = vector.extract_strided_slice %142 {offsets = [1, 0], sizes = [1, 128], strides = [1, 1]} : vector<8x128xf32> to vector<1x128xf32>
    %156 = vector.broadcast %155 : vector<1x128xf32> to vector<16x128xf32>
    %157 = arith.addf %154, %156 : vector<16x128xf32>
    %cst_103 = arith.constant 0.000000e+00 : f32
    %158 = vector.broadcast %cst_103 : f32 to vector<16x128xf32>
    %159 = arith.maximumf %157, %158 : vector<16x128xf32>
    %c896 = arith.constant 896 : index
    %c0_104 = arith.constant 0 : index
    %160 = vector.load %arg7[%c896, %c0_104] : memref<1288x128xf32, #tpu.memory_space<vmem>>, vector<128x128xf32>
    %cst_105 = arith.constant dense<0.000000e+00> : vector<16x128xf32>
    %161 = tpu.matmul %150, %160, %cst_105 {dimension_numbers = #tpu.dot_dimension_numbers<[1], [0], [0], [1], [0, 0, 1, 1], [], []>} : vector<16x128xf32>, vector<128x128xf32>, vector<16x128xf32> -> vector<16x128xf32>
    %c1024 = arith.constant 1024 : index
    %c0_106 = arith.constant 0 : index
    %162 = vector.load %arg7[%c1024, %c0_106] : memref<1288x128xf32, #tpu.memory_space<vmem>>, vector<128x128xf32>
    %cst_107 = arith.constant dense<0.000000e+00> : vector<16x128xf32>
    %163 = tpu.matmul %159, %162, %cst_107 {dimension_numbers = #tpu.dot_dimension_numbers<[1], [0], [0], [1], [0, 0, 1, 1], [], []>} : vector<16x128xf32>, vector<128x128xf32>, vector<16x128xf32> -> vector<16x128xf32>
    %164 = arith.addf %161, %163 : vector<16x128xf32>
    %165 = vector.extract_strided_slice %142 {offsets = [2, 0], sizes = [1, 128], strides = [1, 1]} : vector<8x128xf32> to vector<1x128xf32>
    %166 = vector.broadcast %165 : vector<1x128xf32> to vector<16x128xf32>
    %167 = arith.addf %164, %166 : vector<16x128xf32>
    %cst_108 = arith.constant 0.000000e+00 : f32
    %168 = vector.broadcast %cst_108 : f32 to vector<16x128xf32>
    %169 = arith.maximumf %167, %168 : vector<16x128xf32>
    %170 = tpu.iota {dimensions = array<i32: 0>} : vector<16x1xi32>
    %c16_i32 = arith.constant 16 : i32
    %171 = arith.muli %arg1, %c16_i32 : i32
    %172 = vector.broadcast %171 : i32 to vector<16x1xi32>
    %173 = arith.addi %170, %172 : vector<16x1xi32>
    %174 = arith.index_cast %arg0 : i32 to index
    %175 = memref.load %arg2[%174] : memref<2xi32, #tpu.memory_space<smem>>
    %176 = vector.broadcast %175 : i32 to vector<16x1xi32>
    %177 = arith.cmpi slt, %173, %176 : vector<16x1xi32>
    %178 = arith.index_cast %arg0 : i32 to index
    %179 = memref.load %arg3[%178] : memref<2xf32, #tpu.memory_space<smem>>
    %cst_109 = arith.constant 0.000000e+00 : f32
    %180 = vector.broadcast %179 : f32 to vector<16x1xf32>
    %181 = vector.broadcast %cst_109 : f32 to vector<16x1xf32>
    %182 = arith.select %177, %180, %181 : vector<16x1xi1>, vector<16x1xf32>
    %c0_110 = arith.constant 0 : index
    %c0_111 = arith.constant 0 : index
    %183 = vector.load %arg10[%c0_110, %c0_111] : memref<1x128xf32, #tpu.memory_space<vmem>>, vector<1x128xf32>
    %184 = vector.broadcast %182 : vector<16x1xf32> to vector<16x128xf32>
    %185 = arith.mulf %169, %184 : vector<16x128xf32>
    %cst_112 = arith.constant dense<0.000000e+00> : vector<128xf32>
    %186 = vector.multi_reduction <add>, %185, %cst_112 [0] : vector<16x128xf32> to vector<128xf32>
    %187 = vector.shape_cast %186 : vector<128xf32> to vector<1x128xf32>
    %188 = arith.addf %183, %187 : vector<1x128xf32>
    %c0_113 = arith.constant 0 : index
    %c0_114 = arith.constant 0 : index
    %189 = vector.load %arg10[%c0_113, %c0_114] : memref<1x128xf32, #tpu.memory_space<vmem>>, vector<1x128xf32>
    tpu.vector_store %arg10[%c0_113, %c0_114], %188 {strides = array<i32>} : memref<1x128xf32, #tpu.memory_space<vmem>>, vector<1x128xf32>,
    %c0_i32_115 = arith.constant 0 : i32
    %190 = arith.cmpi eq, %arg1, %c0_i32_115 : i32
    %191 = arith.extui %190 : i1 to i32
    %c0_i32_116 = arith.constant 0 : i32
    %192 = arith.cmpi ne, %191, %c0_i32_116 : i32
    scf.if %192 {
      %c0_117 = arith.constant 0 : index
      %c0_118 = arith.constant 0 : index
      %193 = vector.load %arg10[%c0_117, %c0_118] : memref<1x128xf32, #tpu.memory_space<vmem>>, vector<1x128xf32>
      %c1152 = arith.constant 1152 : index
      %c0_119 = arith.constant 0 : index
      %194 = vector.load %arg7[%c1152, %c0_119] : memref<1288x128xf32, #tpu.memory_space<vmem>>, vector<128x128xf32>
      %cst_120 = arith.constant dense<0.000000e+00> : vector<1x128xf32>
      %195 = tpu.matmul %193, %194, %cst_120 {dimension_numbers = #tpu.dot_dimension_numbers<[1], [0], [0], [1], [0, 0, 1, 1], [], []>} : vector<1x128xf32>, vector<128x128xf32>, vector<1x128xf32> -> vector<1x128xf32>
      %196 = vector.extract_strided_slice %142 {offsets = [3, 0], sizes = [1, 128], strides = [1, 1]} : vector<8x128xf32> to vector<1x128xf32>
      %197 = arith.addf %195, %196 : vector<1x128xf32>
      %198 = vector.shape_cast %197 : vector<1x128xf32> to vector<1x128xf32>
      %199 = vector.broadcast %198 : vector<1x128xf32> to vector<8x128xf32>
      %c0_121 = arith.constant 0 : index
      %c0_122 = arith.constant 0 : index
      %c0_123 = arith.constant 0 : index
      %200 = vector.load %arg8[%c0_121, %c0_122, %c0_123] : memref<1x8x128xf32, #tpu.memory_space<vmem>>, vector<1x8x128xf32>
      %201 = vector.shape_cast %200 : vector<1x8x128xf32> to vector<8x128xf32>
      %202 = vector.shape_cast %199 : vector<8x128xf32> to vector<1x8x128xf32>
      tpu.vector_store %arg8[%c0_121, %c0_122, %c0_123], %202 {strides = array<i32>} : memref<1x8x128xf32, #tpu.memory_space<vmem>>, vector<1x8x128xf32>,
    } else {
    }
    return
  }
  func.func @transform_0(%arg0: i32, %arg1: i32, %arg2: memref<2xi32, #tpu.memory_space<smem>>, %arg3: memref<2xf32, #tpu.memory_space<smem>>, %arg4: memref<13xf32, #tpu.memory_space<smem>>) -> (i32, i32, i32, i32) {
    %c0_i32 = arith.constant 0 : i32
    %c0_i32_0 = arith.constant 0 : i32
    %c0_i32_1 = arith.constant 0 : i32
    return %arg0, %c0_i32, %arg1, %c0_i32_0 : i32, i32, i32, i32
  }
  func.func @transform_1(%arg0: i32, %arg1: i32, %arg2: memref<2xi32, #tpu.memory_space<smem>>, %arg3: memref<2xf32, #tpu.memory_space<smem>>, %arg4: memref<13xf32, #tpu.memory_space<smem>>) -> (i32, i32, i32) {
    %c0_i32 = arith.constant 0 : i32
    %c0_i32_0 = arith.constant 0 : i32
    return %arg0, %arg1, %c0_i32 : i32, i32, i32
  }
  func.func @transform_2(%arg0: i32, %arg1: i32, %arg2: memref<2xi32, #tpu.memory_space<smem>>, %arg3: memref<2xf32, #tpu.memory_space<smem>>, %arg4: memref<13xf32, #tpu.memory_space<smem>>) -> (i32, i32) {
    %c0_i32 = arith.constant 0 : i32
    %c0_i32_0 = arith.constant 0 : i32
    %c0_i32_1 = arith.constant 0 : i32
    return %c0_i32, %c0_i32_0 : i32, i32
  }
  func.func @transform_3(%arg0: i32, %arg1: i32, %arg2: memref<2xi32, #tpu.memory_space<smem>>, %arg3: memref<2xf32, #tpu.memory_space<smem>>, %arg4: memref<13xf32, #tpu.memory_space<smem>>) -> (i32, i32, i32) {
    %c0_i32 = arith.constant 0 : i32
    %c0_i32_0 = arith.constant 0 : i32
    %c0_i32_1 = arith.constant 0 : i32
    return %arg0, %c0_i32, %c0_i32_0 : i32, i32, i32
  }
}

</mosaic_0001>

<llo_original>
// kernel: head_forward.1
$region0: #{head_forward.1}
  #allocation0 [shape = 'u32[]', space=smem, size = 0x4, offset = 0x4, fixed_abs, tag = 'smem constant byte address 0x4 - core index']
  #allocation1 [shape = 'u32[144,128]{1,0:T(1,128)}', space=vmem, size = 0x12000, scoped, tag = 'internal scratch']
  #allocation2 [shape = 'f32[16,768]{1,0:T(8,128)}', space=vmem, size = 0xc000, scoped, tag = 'scratch operand']
  #allocation3 [shape = 'f32[1,128]{1,0:T(1,128)}', space=vmem, size = 0x200, scoped, tag = 'scratch operand']
  #allocation4 [shape = 's32[1]{0}', space=sflag, size = 0x4, scoped, tag = 'scoped memory for head_forward.1']
  #allocation5 [shape = 'u8[512]{0}', space=smem, size = 0x200, scoped, tag = 'prefetched SMEM operand 0']
  #allocation6 [shape = 'u8[512]{0}', space=smem, size = 0x200, scoped, tag = 'prefetched SMEM operand 1']
  #allocation7 [shape = 'u8[512]{0}', space=smem, size = 0x200, scoped, tag = 'prefetched SMEM operand 2']
  %s0 = inlined_call_operand.vmem [shape: s32[2], index: 0, kind: input, shape index: {}]
  %s1 = inlined_call_operand.vmem [shape: f32[2], index: 1, kind: input, shape index: {}]
  %s2 = inlined_call_operand.vmem [shape: f32[13], index: 2, kind: input, shape index: {}]
  %s3 = inlined_call_operand.vmem [shape: bf16[2,13,16,768], index: 3, kind: input, shape index: {}]
  %s4 = inlined_call_operand.vmem [shape: f32[2,16,128], index: 4, kind: input, shape index: {}]
  %s5 = inlined_call_operand.vmem [shape: f32[1288,128], index: 5, kind: input, shape index: {}]
  %s6 = inlined_call_operand.vmem [shape: f32[2,8,128], index: 6, kind: output, shape index: {}]
  %s7 = sld [smem:[#allocation0]]
  $region53: #{head_forward.1} parent=0
    _
  %s9 = ssub.s32 1, %s7
  %s10 = scalar_select 0, %s9, %s7
  %s11 = sshll.u32 %s0, 4
  %s12 = int_to_ptr.vmem [resolvable:$true] %s11
  %14 = dma.vmem_to_smem %s12, 16, [#allocation5], [#allocation4]
  %s15 = sshll.u32 %s1, 4
  %s16 = int_to_ptr.vmem [resolvable:$true] %s15
  %18 = dma.vmem_to_smem %s16, 16, [#allocation6], [#allocation4]
  %s19 = sshll.u32 %s2, 4
  %s20 = int_to_ptr.vmem [resolvable:$true] %s19
  %22 = dma.vmem_to_smem %s20, 16, [#allocation7], [#allocation4]
  %23 = dma.done [#allocation4], 48
  %24 = sfence
  loop: start=0, step=1, limit=4
  $region2: #{head_forward.1} parent=0 // loop_pre_header
    _
  $region3: #{head_forward.1} parent=0 // loop_header
    %s26 = sphi 0, %s30
    %p27 = scmp.ge.s32.totalorder %s26, 4
    %s33 = sphi 0, %s45
    %s34 = sphi 0, %s41
    %s35 = sphi 0, %s33
    %s36 = sphi 0, %s34
    %s37 = sphi 0, %s35
    %s38 = sphi 0, %s36
    %s50 = sphi 0, %s52
    %s53 = sphi 0, %s50
    %s54 = sphi 0, %s53
    %s70 = sphi 0, %s54
    %s78 = sphi 0, %s80
    %s81 = sphi 0, %s78
    %s82 = sphi 0, %s81
    %s98 = sphi 0, %s82
    %s102 = sphi 0, %s102
    %s104 = sphi 0, %s102
    %s105 = sphi 0, %s104
    %s119 = sphi 0, %s105
    %s125 = sphi 0, %s127
    %s128 = sphi 0, %s125
    %s129 = sphi 0, %s128
    %s145 = sphi 0, %s129
  $region4: #{head_forward.1} parent=0 // loop_header_branch
    %29 = sbr.rel (%p27) target = $region8
  $region5: #{head_forward.1} parent=0 // loop_body
    %s31 = ssub.s32 %s26, 1
    %s32 = ssub.s32 %s26, 2
    %s39 = sadd.s32 1, %s34
    %p40 = scmp.ge.s32.totalorder %s39, 1
    %s41 = scalar_select %p40, 0, %s39
    %s42 = sadd.s32 1, %s33
    %s43 = scalar_select %p40, %s42, %s33
    %p44 = scmp.ge.s32.totalorder %s43, 2
    %s45 = scalar_select %p44, 0, %s43
    %s46 = ssub.s32 %s33, %s45
    %s47 = ssub.s32 %s34, %s41
    %s48 = sor.u32 %s46, %s47
    %p49 = scmp.eq.s32.totalorder %s48, 0
    %s51 = sadd.s32 %s50, 1
    %s52 = scalar_select %p49, %s50, %s51
    %p55 = pneg %p49
    %p56 = scmp.eq.s32.totalorder %s26, 1
    %p57 = por %p55, %p56
    %p58 = scmp.ne.s32.totalorder %s50, %s53
    %p59 = scmp.eq.s32.totalorder %s26, 0
    %p60 = por %p58, %p59
    %p61 = scmp.ne.s32.totalorder %s50, %s53
    %p62 = scmp.eq.s32.totalorder %s31, 1
    %p63 = por %p61, %p62
    %p64 = scmp.ne.s32.totalorder %s53, %s54
    %p65 = scmp.eq.s32.totalorder %s31, 0
    %p66 = por %p64, %p65
    %p67 = scmp.ne.s32.totalorder %s53, %s54
    %p68 = scmp.eq.s32.totalorder %s32, 1
    %p69 = por %p67, %p68
    %p71 = scmp.ne.s32.totalorder %s54, %s70
    %p72 = scmp.eq.s32.totalorder %s32, 0
    %p73 = por %p71, %p72
    %s74 = ssub.s32 %s33, %s45
    %s75 = ssub.s32 %s34, %s41
    %s76 = sor.u32 %s74, %s75
    %p77 = scmp.eq.s32.totalorder %s76, 0
    %s79 = sadd.s32 %s78, 1
    %s80 = scalar_select %p77, %s78, %s79
    %p83 = pneg %p77
    %p84 = scmp.eq.s32.totalorder %s26, 1
    %p85 = por %p83, %p84
    %p86 = scmp.ne.s32.totalorder %s78, %s81
    %p87 = scmp.eq.s32.totalorder %s26, 0
    %p88 = por %p86, %p87
    %p89 = scmp.ne.s32.totalorder %s78, %s81
    %p90 = scmp.eq.s32.totalorder %s31, 1
    %p91 = por %p89, %p90
    %p92 = scmp.ne.s32.totalorder %s81, %s82
    %p93 = scmp.eq.s32.totalorder %s31, 0
    %p94 = por %p92, %p93
    %p95 = scmp.ne.s32.totalorder %s81, %s82
    %p96 = scmp.eq.s32.totalorder %s32, 1
    %p97 = por %p95, %p96
    %p99 = scmp.ne.s32.totalorder %s82, %s98
    %p100 = scmp.eq.s32.totalorder %s32, 0
    %p101 = por %p99, %p100
    %s103 = sadd.s32 %s102, 1
    %p106 = scmp.eq.s32.totalorder %s26, 1
    %p107 = scmp.ne.s32.totalorder %s102, %s104
    %p108 = scmp.eq.s32.totalorder %s26, 0
    %p109 = por %p107, %p108
    %p110 = scmp.ne.s32.totalorder %s102, %s104
    %p111 = scmp.eq.s32.totalorder %s31, 1
    %p112 = por %p110, %p111
    %p113 = scmp.ne.s32.totalorder %s104, %s105
    %p114 = scmp.eq.s32.totalorder %s31, 0
    %p115 = por %p113, %p114
    %p116 = scmp.ne.s32.totalorder %s104, %s105
    %p117 = scmp.eq.s32.totalorder %s32, 1
    %p118 = por %p116, %p117
    %p120 = scmp.ne.s32.totalorder %s105, %s119
    %p121 = scmp.eq.s32.totalorder %s32, 0
    %p122 = por %p120, %p121
    %s123 = ssub.s32 %s33, %s45
    %p124 = scmp.eq.s32.totalorder %s123, 0
    %s126 = sadd.s32 %s125, 1
    %s127 = scalar_select %p124, %s125, %s126
    %p130 = pneg %p124
    %p131 = scmp.eq.s32.totalorder %s26, 1
    %p132 = por %p130, %p131
    %p133 = scmp.ne.s32.totalorder %s125, %s128
    %p134 = scmp.eq.s32.totalorder %s26, 0
    %p135 = por %p133, %p134
    %p136 = scmp.ne.s32.totalorder %s125, %s128
    %p137 = scmp.eq.s32.totalorder %s31, 1
    %p138 = por %p136, %p137
    %p139 = scmp.ne.s32.totalorder %s128, %s129
    %p140 = scmp.eq.s32.totalorder %s31, 0
    %p141 = por %p139, %p140
    %p142 = scmp.ne.s32.totalorder %s128, %s129
    %p143 = scmp.eq.s32.totalorder %s32, 1
    %p144 = por %p142, %p143
    %p146 = scmp.ne.s32.totalorder %s129, %s145
    %p147 = scmp.eq.s32.totalorder %s32, 0
    %p148 = por %p146, %p147
    %p149 = scmp.le.s32.totalorder 1, %s26
    %p150 = scmp.lt.s32.totalorder %s26, 3
    %p151 = pnand %p149, %p150
    %p152 = pneg %p151
    // Predicated region
    $region9: #{head_forward.1} parent=5 // pred_check
      _
    $region10: #{head_forward.1} parent=5 // pred_check_branch
      %154 = sbr.rel (%p151) target = $region12
    $region11: #{head_forward.1} parent=5 // pred_region
      %s155 = ssub.s32 %s26, 1
      // Predicated region
      $region13: #{head_forward.1} parent=11 // pred_check
        %p156 = pneg %p115
      $region14: #{head_forward.1} parent=11 // pred_check_branch
        %158 = sbr.rel (%p156) target = $region16
      $region15: #{head_forward.1} parent=11 // pred_region
        _
      $region16: #{head_forward.1} parent=11 // pred_fallthru
        _
    $region12: #{head_forward.1} parent=5 // pred_fallthru
      _
    %p159 = scmp.lt.s32.totalorder %s26, 2
    // Predicated region
    $region17: #{head_forward.1} parent=5 // pred_check
      %p160 = pneg %p159
    $region18: #{head_forward.1} parent=5 // pred_check_branch
      %162 = sbr.rel (%p160) target = $region20
    $region19: #{head_forward.1} parent=5 // pred_region
      // Predicated region
      $region21: #{head_forward.1} parent=19 // pred_check
        %p163 = pneg %p60
      $region22: #{head_forward.1} parent=19 // pred_check_branch
        %165 = sbr.rel (%p163) target = $region24
      $region23: #{head_forward.1} parent=19 // pred_region
        %s166 = smul.u32 2, %s34
        %p167 = scmp.lt.s32.totalorder %s33, 1
        %s168 = scalar_select %p167, %s33, 1
        %p169 = scmp.lt.s32.totalorder %s166, 1
        %s170 = scalar_select %p169, %s166, 1
        %s171 = smul.addr %s170, 6
        %s172 = smul.addr %s168, 156
        %s173 = sadd.s32 %s171, %s172
        %s174 = smul.addr %s173, 4
        %s175 = scalar_lea.vmem %s3, %s174
        %s176 = smul.u32 2, %s34
      $region24: #{head_forward.1} parent=19 // pred_fallthru
        _
      // Predicated region
      $region25: #{head_forward.1} parent=19 // pred_check
        %p177 = pneg %p88
      $region26: #{head_forward.1} parent=19 // pred_check_branch
        %179 = sbr.rel (%p177) target = $region28
      $region27: #{head_forward.1} parent=19 // pred_region
        %s180 = smul.u32 2, %s34
        %p181 = scmp.lt.s32.totalorder %s33, 1
        %s182 = scalar_select %p181, %s33, 1
        %p183 = scmp.lt.s32.totalorder %s180, 1
        %s184 = scalar_select %p183, %s180, 1
        %s185 = smul.addr %s182, 2
        %s186 = sadd.s32 %s184, %s185
        %s187 = smul.addr %s186, 8
        %s188 = scalar_lea.vmem %s4, %s187
        %s189 = smul.u32 2, %s34
      $region28: #{head_forward.1} parent=19 // pred_fallthru
        _
    $region20: #{head_forward.1} parent=5 // pred_fallthru
      _
    %p190 = scmp.le.s32.totalorder 1, %s26
    %p191 = scmp.lt.s32.totalorder %s26, 3
    %p192 = pnand %p190, %p191
    %p193 = pneg %p192
    // Predicated region
    $region29: #{head_forward.1} parent=5 // pred_check
      _
    $region30: #{head_forward.1} parent=5 // pred_check_branch
      %195 = sbr.rel (%p192) target = $region32
    $region31: #{head_forward.1} parent=5 // pred_region
      %s196 = ssub.s32 %s26, 1
      %s197 = smul.u32 2, %s36
      %p198 = scmp.lt.s32.totalorder %s35, 1
      %s199 = scalar_select %p198, %s35, 1
      %p200 = scmp.lt.s32.totalorder %s197, 1
      %s201 = scalar_select %p200, %s197, 1
      %s202 = smul.addr %s201, 6
      %s203 = smul.addr %s199, 156
      %s204 = sadd.s32 %s202, %s203
      %s205 = smul.addr %s204, 4
      %s206 = scalar_lea.vmem %s3, %s205
      %p207 = pneg %p66
      %p208 = pneg %p63
      %s209 = smul.u32 2, %s36
      %p210 = scmp.lt.s32.totalorder %s35, 1
      %s211 = scalar_select %p210, %s35, 1
      %p212 = scmp.lt.s32.totalorder %s209, 1
      %s213 = scalar_select %p212, %s209, 1
      %s214 = smul.addr %s211, 2
      %s215 = sadd.s32 %s213, %s214
      %s216 = smul.addr %s215, 8
      %s217 = scalar_lea.vmem %s4, %s216
      %p218 = pneg %p94
      %p219 = pneg %p91
      %p220 = pneg %p115
      %p221 = pneg %p112
      %p222 = pneg %p141
      %p223 = pneg %p138
      %p224 = scmp.lt.s32.totalorder %s35, 1
      %s225 = scalar_select %p224, %s35, 1
      %s226 = smul.addr %s225, 8
      %s227 = scalar_lea.vmem %s6, %s226
      %s228 = smul.u32 2, %s36
      %p229 = scmp.lt.s32.totalorder %s35, 1
      %s230 = scalar_select %p229, %s35, 1
      %p231 = scmp.lt.s32.totalorder %s228, 1
      %s232 = scalar_select %p231, %s228, 1
      %s233 = smul.addr %s232, 6
      %s234 = smul.addr %s230, 156
      %s235 = sadd.s32 %s233, %s234
      %s236 = smul.addr %s235, 4
      %s237 = scalar_lea.vmem %s3, %s236
      %s238 = smul.u32 2, %s36
      %s239 = smul.u32 2, %s36
      %p240 = scmp.lt.s32.totalorder %s35, 1
      %s241 = scalar_select %p240, %s35, 1
      %p242 = scmp.lt.s32.totalorder %s239, 1
      %s243 = scalar_select %p242, %s239, 1
      %s244 = smul.addr %s241, 2
      %s245 = sadd.s32 %s243, %s244
      %s246 = smul.addr %s245, 8
      %s247 = scalar_lea.vmem %s4, %s246
      %s248 = smul.u32 2, %s36
      %p249 = scmp.lt.s32.totalorder %s35, 1
      %s250 = scalar_select %p249, %s35, 1
      %s251 = smul.addr %s250, 8
      %s252 = scalar_lea.vmem %s6, %s251
      %p253 = scmp.eq.s32.totalorder %s36, 0
      // Predicated region
      $region33: #{head_forward.1} parent=31 // pred_check
        %p254 = pneg %p253
      $region34: #{head_forward.1} parent=31 // pred_check_branch
        %256 = sbr.rel (%p254) target = $region36
      $region35: #{head_forward.1} parent=31 // pred_region
        %257 = vst [vmem:[#allocation3] sm:$0x1] 0.0
      $region36: #{head_forward.1} parent=31 // pred_fallthru
        _
      %s258 = sld [smem:[#allocation7]]
      %v259 = vld [vmem:[%s237] sm:$0xff]
      %v260 = vld [vmem:[%s237 + $0x8] sm:$0xff]
      %v261 = vld [vmem:[%s237 + $0x10] sm:$0xff]
      %v262 = vld [vmem:[%s237 + $0x18] sm:$0xff]
      %v263 = vld [vmem:[%s237 + $0x20] sm:$0xff]
      %v264 = vld [vmem:[%s237 + $0x28] sm:$0xff]
      %v265 = vunpack.c.l.bf16 %v259
      %v266 = vunpack.c.h.bf16 %v259
      %v267 = vunpack.c.l.bf16 %v260
      %v268 = vunpack.c.h.bf16 %v260
      %v269 = vunpack.c.l.bf16 %v261
      %v270 = vunpack.c.h.bf16 %v261
      %v271 = vunpack.c.l.bf16 %v262
      %v272 = vunpack.c.h.bf16 %v262
      %v273 = vunpack.c.l.bf16 %v263
      %v274 = vunpack.c.h.bf16 %v263
      %v275 = vunpack.c.l.bf16 %v264
      %v276 = vunpack.c.h.bf16 %v264
      %v277 = vstv %s258
      %v278 = vmul.f32 %v277, %v265
      %v279 = vmul.f32 %v277, %v266
      %v280 = vmul.f32 %v277, %v267
      %v281 = vmul.f32 %v277, %v268
      %v282 = vmul.f32 %v277, %v269
      %v283 = vmul.f32 %v277, %v270
      %v284 = vmul.f32 %v277, %v271
      %v285 = vmul.f32 %v277, %v272
      %v286 = vmul.f32 %v277, %v273
      %v287 = vmul.f32 %v277, %v274
      %v288 = vmul.f32 %v277, %v275
      %v289 = vmul.f32 %v277, %v276
      %290 = vst [vmem:[#allocation2] sm:$0xff] %v278
      %291 = vst [vmem:[#allocation2 + $0x8] sm:$0xff] %v279
      %292 = vst [vmem:[#allocation2 + $0x10] sm:$0xff] %v280
      %293 = vst [vmem:[#allocation2 + $0x18] sm:$0xff] %v281
      %294 = vst [vmem:[#allocation2 + $0x20] sm:$0xff] %v282
      %295 = vst [vmem:[#allocation2 + $0x28] sm:$0xff] %v283
      %296 = vst [vmem:[#allocation2 + $0x30] sm:$0xff] %v284
      %297 = vst [vmem:[#allocation2 + $0x38] sm:$0xff] %v285
      %298 = vst [vmem:[#allocation2 + $0x40] sm:$0xff] %v286
      %299 = vst [vmem:[#allocation2 + $0x48] sm:$0xff] %v287
      %300 = vst [vmem:[#allocation2 + $0x50] sm:$0xff] %v288
      %301 = vst [vmem:[#allocation2 + $0x58] sm:$0xff] %v289
      %v302 = vld [vmem:[#allocation2] sm:$0xff]
      %v303 = vld [vmem:[#allocation2 + $0x8] sm:$0xff]
      %v304 = vld [vmem:[#allocation2 + $0x10] sm:$0xff]
      %v305 = vld [vmem:[#allocation2 + $0x18] sm:$0xff]
      %v306 = vld [vmem:[#allocation2 + $0x20] sm:$0xff]
      %v307 = vld [vmem:[#allocation2 + $0x28] sm:$0xff]
      %v308 = vld [vmem:[#allocation2 + $0x30] sm:$0xff]
      %v309 = vld [vmem:[#allocation2 + $0x38] sm:$0xff]
      %v310 = vld [vmem:[#allocation2 + $0x40] sm:$0xff]
      %v311 = vld [vmem:[#allocation2 + $0x48] sm:$0xff]
      %v312 = vld [vmem:[#allocation2 + $0x50] sm:$0xff]
      %v313 = vld [vmem:[#allocation2 + $0x58] sm:$0xff]
      %s314 = sld [smem:[#allocation7 + $0x1]]
      %s315 = scalar_lea.vmem %s237, 48
      %v316 = vld [vmem:[%s315] sm:$0xff]
      %v317 = vld [vmem:[%s315 + $0x8] sm:$0xff]
      %v318 = vld [vmem:[%s315 + $0x10] sm:$0xff]
      %v319 = vld [vmem:[%s315 + $0x18] sm:$0xff]
      %v320 = vld [vmem:[%s315 + $0x20] sm:$0xff]
      %v321 = vld [vmem:[%s315 + $0x28] sm:$0xff]
      %v322 = vunpack.c.l.bf16 %v316
      %v323 = vunpack.c.h.bf16 %v316
      %v324 = vunpack.c.l.bf16 %v317
      %v325 = vunpack.c.h.bf16 %v317
      %v326 = vunpack.c.l.bf16 %v318
      %v327 = vunpack.c.h.bf16 %v318
      %v328 = vunpack.c.l.bf16 %v319
      %v329 = vunpack.c.h.bf16 %v319
      %v330 = vunpack.c.l.bf16 %v320
      %v331 = vunpack.c.h.bf16 %v320
      %v332 = vunpack.c.l.bf16 %v321
      %v333 = vunpack.c.h.bf16 %v321
      %v334 = vstv %s314
      %v335 = vmul.f32 %v334, %v322
      %v336 = vmul.f32 %v334, %v323
      %v337 = vmul.f32 %v334, %v324
      %v338 = vmul.f32 %v334, %v325
      %v339 = vmul.f32 %v334, %v326
      %v340 = vmul.f32 %v334, %v327
      %v341 = vmul.f32 %v334, %v328
      %v342 = vmul.f32 %v334, %v329
      %v343 = vmul.f32 %v334, %v330
      %v344 = vmul.f32 %v334, %v331
      %v345 = vmul.f32 %v334, %v332
      %v346 = vmul.f32 %v334, %v333
      %v347 = vadd.f32 %v302, %v335
      %v348 = vadd.f32 %v303, %v336
      %v349 = vadd.f32 %v304, %v337
      %v350 = vadd.f32 %v305, %v338
      %v351 = vadd.f32 %v306, %v339
      %v352 = vadd.f32 %v307, %v340
      %v353 = vadd.f32 %v308, %v341
      %v354 = vadd.f32 %v309, %v342
      %v355 = vadd.f32 %v310, %v343
      %v356 = vadd.f32 %v311, %v344
      %v357 = vadd.f32 %v312, %v345
      %v358 = vadd.f32 %v313, %v346
      %359 = vst [vmem:[#allocation2] sm:$0xff] %v347
      %360 = vst [vmem:[#allocation2 + $0x8] sm:$0xff] %v348
      %361 = vst [vmem:[#allocation2 + $0x10] sm:$0xff] %v349
      %362 = vst [vmem:[#allocation2 + $0x18] sm:$0xff] %v350
      %363 = vst [vmem:[#allocation2 + $0x20] sm:$0xff] %v351
      %364 = vst [vmem:[#allocation2 + $0x28] sm:$0xff] %v352
      %365 = vst [vmem:[#allocation2 + $0x30] sm:$0xff] %v353
      %366 = vst [vmem:[#allocation2 + $0x38] sm:$0xff] %v354
      %367 = vst [vmem:[#allocation2 + $0x40] sm:$0xff] %v355
      %368 = vst [vmem:[#allocation2 + $0x48] sm:$0xff] %v356
      %369 = vst [vmem:[#allocation2 + $0x50] sm:$0xff] %v357
      %370 = vst [vmem:[#allocation2 + $0x58] sm:$0xff] %v358
      %v371 = vld [vmem:[#allocation2] sm:$0xff]
      %v372 = vld [vmem:[#allocation2 + $0x8] sm:$0xff]
      %v373 = vld [vmem:[#allocation2 + $0x10] sm:$0xff]
      %v374 = vld [vmem:[#allocation2 + $0x18] sm:$0xff]
      %v375 = vld [vmem:[#allocation2 + $0x20] sm:$0xff]
      %v376 = vld [vmem:[#allocation2 + $0x28] sm:$0xff]
      %v377 = vld [vmem:[#allocation2 + $0x30] sm:$0xff]
      %v378 = vld [vmem:[#allocation2 + $0x38] sm:$0xff]
      %v379 = vld [vmem:[#allocation2 + $0x40] sm:$0xff]
      %v380 = vld [vmem:[#allocation2 + $0x48] sm:$0xff]
      %v381 = vld [vmem:[#allocation2 + $0x50] sm:$0xff]
      %v382 = vld [vmem:[#allocation2 + $0x58] sm:$0xff]
      %s383 = sld [smem:[#allocation7 + $0x2]]
      %s384 = scalar_lea.vmem %s237, 96
      %v385 = vld [vmem:[%s384] sm:$0xff]
      %v386 = vld [vmem:[%s384 + $0x8] sm:$0xff]
      %v387 = vld [vmem:[%s384 + $0x10] sm:$0xff]
      %v388 = vld [vmem:[%s384 + $0x18] sm:$0xff]
      %v389 = vld [vmem:[%s384 + $0x20] sm:$0xff]
      %v390 = vld [vmem:[%s384 + $0x28] sm:$0xff]
      %v391 = vunpack.c.l.bf16 %v385
      %v392 = vunpack.c.h.bf16 %v385
      %v393 = vunpack.c.l.bf16 %v386
      %v394 = vunpack.c.h.bf16 %v386
      %v395 = vunpack.c.l.bf16 %v387
      %v396 = vunpack.c.h.bf16 %v387
      %v397 = vunpack.c.l.bf16 %v388
      %v398 = vunpack.c.h.bf16 %v388
      %v399 = vunpack.c.l.bf16 %v389
      %v400 = vunpack.c.h.bf16 %v389
      %v401 = vunpack.c.l.bf16 %v390
      %v402 = vunpack.c.h.bf16 %v390
      %v403 = vstv %s383
      %v404 = vmul.f32 %v403, %v391
      %v405 = vmul.f32 %v403, %v392
      %v406 = vmul.f32 %v403, %v393
      %v407 = vmul.f32 %v403, %v394
      %v408 = vmul.f32 %v403, %v395
      %v409 = vmul.f32 %v403, %v396
      %v410 = vmul.f32 %v403, %v397
      %v411 = vmul.f32 %v403, %v398
      %v412 = vmul.f32 %v403, %v399
      %v413 = vmul.f32 %v403, %v400
      %v414 = vmul.f32 %v403, %v401
      %v415 = vmul.f32 %v403, %v402
      %v416 = vadd.f32 %v371, %v404
      %v417 = vadd.f32 %v372, %v405
      %v418 = vadd.f32 %v373, %v406
      %v419 = vadd.f32 %v374, %v407
      %v420 = vadd.f32 %v375, %v408
      %v421 = vadd.f32 %v376, %v409
      %v422 = vadd.f32 %v377, %v410
      %v423 = vadd.f32 %v378, %v411
      %v424 = vadd.f32 %v379, %v412
      %v425 = vadd.f32 %v380, %v413
      %v426 = vadd.f32 %v381, %v414
      %v427 = vadd.f32 %v382, %v415
      %428 = vst [vmem:[#allocation2] sm:$0xff] %v416
      %429 = vst [vmem:[#allocation2 + $0x8] sm:$0xff] %v417
      %430 = vst [vmem:[#allocation2 + $0x10] sm:$0xff] %v418
      %431 = vst [vmem:[#allocation2 + $0x18] sm:$0xff] %v419
      %432 = vst [vmem:[#allocation2 + $0x20] sm:$0xff] %v420
      %433 = vst [vmem:[#allocation2 + $0x28] sm:$0xff] %v421
      %434 = vst [vmem:[#allocation2 + $0x30] sm:$0xff] %v422
      %435 = vst [vmem:[#allocation2 + $0x38] sm:$0xff] %v423
      %436 = vst [vmem:[#allocation2 + $0x40] sm:$0xff] %v424
      %437 = vst [vmem:[#allocation2 + $0x48] sm:$0xff] %v425
      %438 = vst [vmem:[#allocation2 + $0x50] sm:$0xff] %v426
      %439 = vst [vmem:[#allocation2 + $0x58] sm:$0xff] %v427
      %v440 = vld [vmem:[#allocation2] sm:$0xff]
      %v441 = vld [vmem:[#allocation2 + $0x8] sm:$0xff]
      %v442 = vld [vmem:[#allocation2 + $0x10] sm:$0xff]
      %v443 = vld [vmem:[#allocation2 + $0x18] sm:$0xff]
      %v444 = vld [vmem:[#allocation2 + $0x20] sm:$0xff]
      %v445 = vld [vmem:[#allocation2 + $0x28] sm:$0xff]
      %v446 = vld [vmem:[#allocation2 + $0x30] sm:$0xff]
      %v447 = vld [vmem:[#allocation2 + $0x38] sm:$0xff]
      %v448 = vld [vmem:[#allocation2 + $0x40] sm:$0xff]
      %v449 = vld [vmem:[#allocation2 + $0x48] sm:$0xff]
      %v450 = vld [vmem:[#allocation2 + $0x50] sm:$0xff]
      %v451 = vld [vmem:[#allocation2 + $0x58] sm:$0xff]
      %s452 = sld [smem:[#allocation7 + $0x3]]
      %s453 = scalar_lea.vmem %s237, 144
      %v454 = vld [vmem:[%s453] sm:$0xff]
      %v455 = vld [vmem:[%s453 + $0x8] sm:$0xff]
      %v456 = vld [vmem:[%s453 + $0x10] sm:$0xff]
      %v457 = vld [vmem:[%s453 + $0x18] sm:$0xff]
      %v458 = vld [vmem:[%s453 + $0x20] sm:$0xff]
      %v459 = vld [vmem:[%s453 + $0x28] sm:$0xff]
      %v460 = vunpack.c.l.bf16 %v454
      %v461 = vunpack.c.h.bf16 %v454
      %v462 = vunpack.c.l.bf16 %v455
      %v463 = vunpack.c.h.bf16 %v455
      %v464 = vunpack.c.l.bf16 %v456
      %v465 = vunpack.c.h.bf16 %v456
      %v466 = vunpack.c.l.bf16 %v457
      %v467 = vunpack.c.h.bf16 %v457
      %v468 = vunpack.c.l.bf16 %v458
      %v469 = vunpack.c.h.bf16 %v458
      %v470 = vunpack.c.l.bf16 %v459
      %v471 = vunpack.c.h.bf16 %v459
      %v472 = vstv %s452
      %v473 = vmul.f32 %v472, %v460
      %v474 = vmul.f32 %v472, %v461
      %v475 = vmul.f32 %v472, %v462
      %v476 = vmul.f32 %v472, %v463
      %v477 = vmul.f32 %v472, %v464
      %v478 = vmul.f32 %v472, %v465
      %v479 = vmul.f32 %v472, %v466
      %v480 = vmul.f32 %v472, %v467
      %v481 = vmul.f32 %v472, %v468
      %v482 = vmul.f32 %v472, %v469
      %v483 = vmul.f32 %v472, %v470
      %v484 = vmul.f32 %v472, %v471
      %v485 = vadd.f32 %v440, %v473
      %v486 = vadd.f32 %v441, %v474
      %v487 = vadd.f32 %v442, %v475
      %v488 = vadd.f32 %v443, %v476
      %v489 = vadd.f32 %v444, %v477
      %v490 = vadd.f32 %v445, %v478
      %v491 = vadd.f32 %v446, %v479
      %v492 = vadd.f32 %v447, %v480
      %v493 = vadd.f32 %v448, %v481
      %v494 = vadd.f32 %v449, %v482
      %v495 = vadd.f32 %v450, %v483
      %v496 = vadd.f32 %v451, %v484
      %497 = vst [vmem:[#allocation2] sm:$0xff] %v485
      %498 = vst [vmem:[#allocation2 + $0x8] sm:$0xff] %v486
      %499 = vst [vmem:[#allocation2 + $0x10] sm:$0xff] %v487
      %500 = vst [vmem:[#allocation2 + $0x18] sm:$0xff] %v488
      %501 = vst [vmem:[#allocation2 + $0x20] sm:$0xff] %v489
      %502 = vst [vmem:[#allocation2 + $0x28] sm:$0xff] %v490
      %503 = vst [vmem:[#allocation2 + $0x30] sm:$0xff] %v491
      %504 = vst [vmem:[#allocation2 + $0x38] sm:$0xff] %v492
      %505 = vst [vmem:[#allocation2 + $0x40] sm:$0xff] %v493
      %506 = vst [vmem:[#allocation2 + $0x48] sm:$0xff] %v494
      %507 = vst [vmem:[#allocation2 + $0x50] sm:$0xff] %v495
      %508 = vst [vmem:[#allocation2 + $0x58] sm:$0xff] %v496
      %v509 = vld [vmem:[#allocation2] sm:$0xff]
      %v510 = vld [vmem:[#allocation2 + $0x8] sm:$0xff]
      %v511 = vld [vmem:[#allocation2 + $0x10] sm:$0xff]
      %v512 = vld [vmem:[#allocation2 + $0x18] sm:$0xff]
      %v513 = vld [vmem:[#allocation2 + $0x20] sm:$0xff]
      %v514 = vld [vmem:[#allocation2 + $0x28] sm:$0xff]
      %v515 = vld [vmem:[#allocation2 + $0x30] sm:$0xff]
      %v516 = vld [vmem:[#allocation2 + $0x38] sm:$0xff]
      %v517 = vld [vmem:[#allocation2 + $0x40] sm:$0xff]
      %v518 = vld [vmem:[#allocation2 + $0x48] sm:$0xff]
      %v519 = vld [vmem:[#allocation2 + $0x50] sm:$0xff]
      %v520 = vld [vmem:[#allocation2 + $0x58] sm:$0xff]
      %s521 = sld [smem:[#allocation7 + $0x4]]
      %s522 = scalar_lea.vmem %s237, 192
      %v523 = vld [vmem:[%s522] sm:$0xff]
      %v524 = vld [vmem:[%s522 + $0x8] sm:$0xff]
      %v525 = vld [vmem:[%s522 + $0x10] sm:$0xff]
      %v526 = vld [vmem:[%s522 + $0x18] sm:$0xff]
      %v527 = vld [vmem:[%s522 + $0x20] sm:$0xff]
      %v528 = vld [vmem:[%s522 + $0x28] sm:$0xff]
      %v529 = vunpack.c.l.bf16 %v523
      %v530 = vunpack.c.h.bf16 %v523
      %v531 = vunpack.c.l.bf16 %v524
      %v532 = vunpack.c.h.bf16 %v524
      %v533 = vunpack.c.l.bf16 %v525
      %v534 = vunpack.c.h.bf16 %v525
      %v535 = vunpack.c.l.bf16 %v526
      %v536 = vunpack.c.h.bf16 %v526
      %v537 = vunpack.c.l.bf16 %v527
      %v538 = vunpack.c.h.bf16 %v527
      %v539 = vunpack.c.l.bf16 %v528
      %v540 = vunpack.c.h.bf16 %v528
      %v541 = vstv %s521
      %v542 = vmul.f32 %v541, %v529
      %v543 = vmul.f32 %v541, %v530
      %v544 = vmul.f32 %v541, %v531
      %v545 = vmul.f32 %v541, %v532
      %v546 = vmul.f32 %v541, %v533
      %v547 = vmul.f32 %v541, %v534
      %v548 = vmul.f32 %v541, %v535
      %v549 = vmul.f32 %v541, %v536
      %v550 = vmul.f32 %v541, %v537
      %v551 = vmul.f32 %v541, %v538
      %v552 = vmul.f32 %v541, %v539
      %v553 = vmul.f32 %v541, %v540
      %v554 = vadd.f32 %v509, %v542
      %v555 = vadd.f32 %v510, %v543
      %v556 = vadd.f32 %v511, %v544
      %v557 = vadd.f32 %v512, %v545
      %v558 = vadd.f32 %v513, %v546
      %v559 = vadd.f32 %v514, %v547
      %v560 = vadd.f32 %v515, %v548
      %v561 = vadd.f32 %v516, %v549
      %v562 = vadd.f32 %v517, %v550
      %v563 = vadd.f32 %v518, %v551
      %v564 = vadd.f32 %v519, %v552
      %v565 = vadd.f32 %v520, %v553
      %566 = vst [vmem:[#allocation2] sm:$0xff] %v554
      %567 = vst [vmem:[#allocation2 + $0x8] sm:$0xff] %v555
      %568 = vst [vmem:[#allocation2 + $0x10] sm:$0xff] %v556
      %569 = vst [vmem:[#allocation2 + $0x18] sm:$0xff] %v557
      %570 = vst [vmem:[#allocation2 + $0x20] sm:$0xff] %v558
      %571 = vst [vmem:[#allocation2 + $0x28] sm:$0xff] %v559
      %572 = vst [vmem:[#allocation2 + $0x30] sm:$0xff] %v560
      %573 = vst [vmem:[#allocation2 + $0x38] sm:$0xff] %v561
      %574 = vst [vmem:[#allocation2 + $0x40] sm:$0xff] %v562
      %575 = vst [vmem:[#allocation2 + $0x48] sm:$0xff] %v563
      %576 = vst [vmem:[#allocation2 + $0x50] sm:$0xff] %v564
      %577 = vst [vmem:[#allocation2 + $0x58] sm:$0xff] %v565
      %v578 = vld [vmem:[#allocation2] sm:$0xff]
      %v579 = vld [vmem:[#allocation2 + $0x8] sm:$0xff]
      %v580 = vld [vmem:[#allocation2 + $0x10] sm:$0xff]
      %v581 = vld [vmem:[#allocation2 + $0x18] sm:$0xff]
      %v582 = vld [vmem:[#allocation2 + $0x20] sm:$0xff]
      %v583 = vld [vmem:[#allocation2 + $0x28] sm:$0xff]
      %v584 = vld [vmem:[#allocation2 + $0x30] sm:$0xff]
      %v585 = vld [vmem:[#allocation2 + $0x38] sm:$0xff]
      %v586 = vld [vmem:[#allocation2 + $0x40] sm:$0xff]
      %v587 = vld [vmem:[#allocation2 + $0x48] sm:$0xff]
      %v588 = vld [vmem:[#allocation2 + $0x50] sm:$0xff]
      %v589 = vld [vmem:[#allocation2 + $0x58] sm:$0xff]
      %s590 = sld [smem:[#allocation7 + $0x5]]
      %s591 = scalar_lea.vmem %s237, 240
      %v592 = vld [vmem:[%s591] sm:$0xff]
      %v593 = vld [vmem:[%s591 + $0x8] sm:$0xff]
      %v594 = vld [vmem:[%s591 + $0x10] sm:$0xff]
      %v595 = vld [vmem:[%s591 + $0x18] sm:$0xff]
      %v596 = vld [vmem:[%s591 + $0x20] sm:$0xff]
      %v597 = vld [vmem:[%s591 + $0x28] sm:$0xff]
      %v598 = vunpack.c.l.bf16 %v592
      %v599 = vunpack.c.h.bf16 %v592
      %v600 = vunpack.c.l.bf16 %v593
      %v601 = vunpack.c.h.bf16 %v593
      %v602 = vunpack.c.l.bf16 %v594
      %v603 = vunpack.c.h.bf16 %v594
      %v604 = vunpack.c.l.bf16 %v595
      %v605 = vunpack.c.h.bf16 %v595
      %v606 = vunpack.c.l.bf16 %v596
      %v607 = vunpack.c.h.bf16 %v596
      %v608 = vunpack.c.l.bf16 %v597
      %v609 = vunpack.c.h.bf16 %v597
      %v610 = vstv %s590
      %v611 = vmul.f32 %v610, %v598
      %v612 = vmul.f32 %v610, %v599
      %v613 = vmul.f32 %v610, %v600
      %v614 = vmul.f32 %v610, %v601
      %v615 = vmul.f32 %v610, %v602
      %v616 = vmul.f32 %v610, %v603
      %v617 = vmul.f32 %v610, %v604
      %v618 = vmul.f32 %v610, %v605
      %v619 = vmul.f32 %v610, %v606
      %v620 = vmul.f32 %v610, %v607
      %v621 = vmul.f32 %v610, %v608
      %v622 = vmul.f32 %v610, %v609
      %v623 = vadd.f32 %v578, %v611
      %v624 = vadd.f32 %v579, %v612
      %v625 = vadd.f32 %v580, %v613
      %v626 = vadd.f32 %v581, %v614
      %v627 = vadd.f32 %v582, %v615
      %v628 = vadd.f32 %v583, %v616
      %v629 = vadd.f32 %v584, %v617
      %v630 = vadd.f32 %v585, %v618
      %v631 = vadd.f32 %v586, %v619
      %v632 = vadd.f32 %v587, %v620
      %v633 = vadd.f32 %v588, %v621
      %v634 = vadd.f32 %v589, %v622
      %635 = vst [vmem:[#allocation2] sm:$0xff] %v623
      %636 = vst [vmem:[#allocation2 + $0x8] sm:$0xff] %v624
      %637 = vst [vmem:[#allocation2 + $0x10] sm:$0xff] %v625
      %638 = vst [vmem:[#allocation2 + $0x18] sm:$0xff] %v626
      %639 = vst [vmem:[#allocation2 + $0x20] sm:$0xff] %v627
      %640 = vst [vmem:[#allocation2 + $0x28] sm:$0xff] %v628
      %641 = vst [vmem:[#allocation2 + $0x30] sm:$0xff] %v629
      %642 = vst [vmem:[#allocation2 + $0x38] sm:$0xff] %v630
      %643 = vst [vmem:[#allocation2 + $0x40] sm:$0xff] %v631
      %644 = vst [vmem:[#allocation2 + $0x48] sm:$0xff] %v632
      %645 = vst [vmem:[#allocation2 + $0x50] sm:$0xff] %v633
      %646 = vst [vmem:[#allocation2 + $0x58] sm:$0xff] %v634
      %v647 = vld [vmem:[#allocation2] sm:$0xff]
      %v648 = vld [vmem:[#allocation2 + $0x8] sm:$0xff]
      %v649 = vld [vmem:[#allocation2 + $0x10] sm:$0xff]
      %v650 = vld [vmem:[#allocation2 + $0x18] sm:$0xff]
      %v651 = vld [vmem:[#allocation2 + $0x20] sm:$0xff]
      %v652 = vld [vmem:[#allocation2 + $0x28] sm:$0xff]
      %v653 = vld [vmem:[#allocation2 + $0x30] sm:$0xff]
      %v654 = vld [vmem:[#allocation2 + $0x38] sm:$0xff]
      %v655 = vld [vmem:[#allocation2 + $0x40] sm:$0xff]
      %v656 = vld [vmem:[#allocation2 + $0x48] sm:$0xff]
      %v657 = vld [vmem:[#allocation2 + $0x50] sm:$0xff]
      %v658 = vld [vmem:[#allocation2 + $0x58] sm:$0xff]
      %s659 = sld [smem:[#allocation7 + $0x6]]
      %s660 = scalar_lea.vmem %s237, 288
      %v661 = vld [vmem:[%s660] sm:$0xff]
      %v662 = vld [vmem:[%s660 + $0x8] sm:$0xff]
      %v663 = vld [vmem:[%s660 + $0x10] sm:$0xff]
      %v664 = vld [vmem:[%s660 + $0x18] sm:$0xff]
      %v665 = vld [vmem:[%s660 + $0x20] sm:$0xff]
      %v666 = vld [vmem:[%s660 + $0x28] sm:$0xff]
      %v667 = vunpack.c.l.bf16 %v661
      %v668 = vunpack.c.h.bf16 %v661
      %v669 = vunpack.c.l.bf16 %v662
      %v670 = vunpack.c.h.bf16 %v662
      %v671 = vunpack.c.l.bf16 %v663
      %v672 = vunpack.c.h.bf16 %v663
      %v673 = vunpack.c.l.bf16 %v664
      %v674 = vunpack.c.h.bf16 %v664
      %v675 = vunpack.c.l.bf16 %v665
      %v676 = vunpack.c.h.bf16 %v665
      %v677 = vunpack.c.l.bf16 %v666
      %v678 = vunpack.c.h.bf16 %v666
      %v679 = vstv %s659
      %v680 = vmul.f32 %v679, %v667
      %v681 = vmul.f32 %v679, %v668
      %v682 = vmul.f32 %v679, %v669
      %v683 = vmul.f32 %v679, %v670
      %v684 = vmul.f32 %v679, %v671
      %v685 = vmul.f32 %v679, %v672
      %v686 = vmul.f32 %v679, %v673
      %v687 = vmul.f32 %v679, %v674
      %v688 = vmul.f32 %v679, %v675
      %v689 = vmul.f32 %v679, %v676
      %v690 = vmul.f32 %v679, %v677
      %v691 = vmul.f32 %v679, %v678
      %v692 = vadd.f32 %v647, %v680
      %v693 = vadd.f32 %v648, %v681
      %v694 = vadd.f32 %v649, %v682
      %v695 = vadd.f32 %v650, %v683
      %v696 = vadd.f32 %v651, %v684
      %v697 = vadd.f32 %v652, %v685
      %v698 = vadd.f32 %v653, %v686
      %v699 = vadd.f32 %v654, %v687
      %v700 = vadd.f32 %v655, %v688
      %v701 = vadd.f32 %v656, %v689
      %v702 = vadd.f32 %v657, %v690
      %v703 = vadd.f32 %v658, %v691
      %704 = vst [vmem:[#allocation2] sm:$0xff] %v692
      %705 = vst [vmem:[#allocation2 + $0x8] sm:$0xff] %v693
      %706 = vst [vmem:[#allocation2 + $0x10] sm:$0xff] %v694
      %707 = vst [vmem:[#allocation2 + $0x18] sm:$0xff] %v695
      %708 = vst [vmem:[#allocation2 + $0x20] sm:$0xff] %v696
      %709 = vst [vmem:[#allocation2 + $0x28] sm:$0xff] %v697
      %710 = vst [vmem:[#allocation2 + $0x30] sm:$0xff] %v698
      %711 = vst [vmem:[#allocation2 + $0x38] sm:$0xff] %v699
      %712 = vst [vmem:[#allocation2 + $0x40] sm:$0xff] %v700
      %713 = vst [vmem:[#allocation2 + $0x48] sm:$0xff] %v701
      %714 = vst [vmem:[#allocation2 + $0x50] sm:$0xff] %v702
      %715 = vst [vmem:[#allocation2 + $0x58] sm:$0xff] %v703
      %v716 = vld [vmem:[#allocation2] sm:$0xff]
      %v717 = vld [vmem:[#allocation2 + $0x8] sm:$0xff]
      %v718 = vld [vmem:[#allocation2 + $0x10] sm:$0xff]
      %v719 = vld [vmem:[#allocation2 + $0x18] sm:$0xff]
      %v720 = vld [vmem:[#allocation2 + $0x20] sm:$0xff]
      %v721 = vld [vmem:[#allocation2 + $0x28] sm:$0xff]
      %v722 = vld [vmem:[#allocation2 + $0x30] sm:$0xff]
      %v723 = vld [vmem:[#allocation2 + $0x38] sm:$0xff]
      %v724 = vld [vmem:[#allocation2 + $0x40] sm:$0xff]
      %v725 = vld [vmem:[#allocation2 + $0x48] sm:$0xff]
      %v726 = vld [vmem:[#allocation2 + $0x50] sm:$0xff]
      %v727 = vld [vmem:[#allocation2 + $0x58] sm:$0xff]
      %s728 = sld [smem:[#allocation7 + $0x7]]
      %s729 = scalar_lea.vmem %s237, 336
      %v730 = vld [vmem:[%s729] sm:$0xff]
      %v731 = vld [vmem:[%s729 + $0x8] sm:$0xff]
      %v732 = vld [vmem:[%s729 + $0x10] sm:$0xff]
      %v733 = vld [vmem:[%s729 + $0x18] sm:$0xff]
      %v734 = vld [vmem:[%s729 + $0x20] sm:$0xff]
      %v735 = vld [vmem:[%s729 + $0x28] sm:$0xff]
      %v736 = vunpack.c.l.bf16 %v730
      %v737 = vunpack.c.h.bf16 %v730
      %v738 = vunpack.c.l.bf16 %v731
      %v739 = vunpack.c.h.bf16 %v731
      %v740 = vunpack.c.l.bf16 %v732
      %v741 = vunpack.c.h.bf16 %v732
      %v742 = vunpack.c.l.bf16 %v733
      %v743 = vunpack.c.h.bf16 %v733
      %v744 = vunpack.c.l.bf16 %v734
      %v745 = vunpack.c.h.bf16 %v734
      %v746 = vunpack.c.l.bf16 %v735
      %v747 = vunpack.c.h.bf16 %v735
      %v748 = vstv %s728
      %v749 = vmul.f32 %v748, %v736
      %v750 = vmul.f32 %v748, %v737
      %v751 = vmul.f32 %v748, %v738
      %v752 = vmul.f32 %v748, %v739
      %v753 = vmul.f32 %v748, %v740
      %v754 = vmul.f32 %v748, %v741
      %v755 = vmul.f32 %v748, %v742
      %v756 = vmul.f32 %v748, %v743
      %v757 = vmul.f32 %v748, %v744
      %v758 = vmul.f32 %v748, %v745
      %v759 = vmul.f32 %v748, %v746
      %v760 = vmul.f32 %v748, %v747
      %v761 = vadd.f32 %v716, %v749
      %v762 = vadd.f32 %v717, %v750
      %v763 = vadd.f32 %v718, %v751
      %v764 = vadd.f32 %v719, %v752
      %v765 = vadd.f32 %v720, %v753
      %v766 = vadd.f32 %v721, %v754
      %v767 = vadd.f32 %v722, %v755
      %v768 = vadd.f32 %v723, %v756
      %v769 = vadd.f32 %v724, %v757
      %v770 = vadd.f32 %v725, %v758
      %v771 = vadd.f32 %v726, %v759
      %v772 = vadd.f32 %v727, %v760
      %773 = vst [vmem:[#allocation2] sm:$0xff] %v761
      %774 = vst [vmem:[#allocation2 + $0x8] sm:$0xff] %v762
      %775 = vst [vmem:[#allocation2 + $0x10] sm:$0xff] %v763
      %776 = vst [vmem:[#allocation2 + $0x18] sm:$0xff] %v764
      %777 = vst [vmem:[#allocation2 + $0x20] sm:$0xff] %v765
      %778 = vst [vmem:[#allocation2 + $0x28] sm:$0xff] %v766
      %779 = vst [vmem:[#allocation2 + $0x30] sm:$0xff] %v767
      %780 = vst [vmem:[#allocation2 + $0x38] sm:$0xff] %v768
      %781 = vst [vmem:[#allocation2 + $0x40] sm:$0xff] %v769
      %782 = vst [vmem:[#allocation2 + $0x48] sm:$0xff] %v770
      %783 = vst [vmem:[#allocation2 + $0x50] sm:$0xff] %v771
      %784 = vst [vmem:[#allocation2 + $0x58] sm:$0xff] %v772
      %v785 = vld [vmem:[#allocation2] sm:$0xff]
      %v786 = vld [vmem:[#allocation2 + $0x8] sm:$0xff]
      %v787 = vld [vmem:[#allocation2 + $0x10] sm:$0xff]
      %v788 = vld [vmem:[#allocation2 + $0x18] sm:$0xff]
      %v789 = vld [vmem:[#allocation2 + $0x20] sm:$0xff]
      %v790 = vld [vmem:[#allocation2 + $0x28] sm:$0xff]
      %v791 = vld [vmem:[#allocation2 + $0x30] sm:$0xff]
      %v792 = vld [vmem:[#allocation2 + $0x38] sm:$0xff]
      %v793 = vld [vmem:[#allocation2 + $0x40] sm:$0xff]
      %v794 = vld [vmem:[#allocation2 + $0x48] sm:$0xff]
      %v795 = vld [vmem:[#allocation2 + $0x50] sm:$0xff]
      %v796 = vld [vmem:[#allocation2 + $0x58] sm:$0xff]
      %s797 = sld [smem:[#allocation7 + $0x8]]
      %s798 = scalar_lea.vmem %s237, 384
      %v799 = vld [vmem:[%s798] sm:$0xff]
      %v800 = vld [vmem:[%s798 + $0x8] sm:$0xff]
      %v801 = vld [vmem:[%s798 + $0x10] sm:$0xff]
      %v802 = vld [vmem:[%s798 + $0x18] sm:$0xff]
      %v803 = vld [vmem:[%s798 + $0x20] sm:$0xff]
      %v804 = vld [vmem:[%s798 + $0x28] sm:$0xff]
      %v805 = vunpack.c.l.bf16 %v799
      %v806 = vunpack.c.h.bf16 %v799
      %v807 = vunpack.c.l.bf16 %v800
      %v808 = vunpack.c.h.bf16 %v800
      %v809 = vunpack.c.l.bf16 %v801
      %v810 = vunpack.c.h.bf16 %v801
      %v811 = vunpack.c.l.bf16 %v802
      %v812 = vunpack.c.h.bf16 %v802
      %v813 = vunpack.c.l.bf16 %v803
      %v814 = vunpack.c.h.bf16 %v803
      %v815 = vunpack.c.l.bf16 %v804
      %v816 = vunpack.c.h.bf16 %v804
      %v817 = vstv %s797
      %v818 = vmul.f32 %v817, %v805
      %v819 = vmul.f32 %v817, %v806
      %v820 = vmul.f32 %v817, %v807
      %v821 = vmul.f32 %v817, %v808
      %v822 = vmul.f32 %v817, %v809
      %v823 = vmul.f32 %v817, %v810
      %v824 = vmul.f32 %v817, %v811
      %v825 = vmul.f32 %v817, %v812
      %v826 = vmul.f32 %v817, %v813
      %v827 = vmul.f32 %v817, %v814
      %v828 = vmul.f32 %v817, %v815
      %v829 = vmul.f32 %v817, %v816
      %v830 = vadd.f32 %v785, %v818
      %v831 = vadd.f32 %v786, %v819
      %v832 = vadd.f32 %v787, %v820
      %v833 = vadd.f32 %v788, %v821
      %v834 = vadd.f32 %v789, %v822
      %v835 = vadd.f32 %v790, %v823
      %v836 = vadd.f32 %v791, %v824
      %v837 = vadd.f32 %v792, %v825
      %v838 = vadd.f32 %v793, %v826
      %v839 = vadd.f32 %v794, %v827
      %v840 = vadd.f32 %v795, %v828
      %v841 = vadd.f32 %v796, %v829
      %842 = vst [vmem:[#allocation2] sm:$0xff] %v830
      %843 = vst [vmem:[#allocation2 + $0x8] sm:$0xff] %v831
      %844 = vst [vmem:[#allocation2 + $0x10] sm:$0xff] %v832
      %845 = vst [vmem:[#allocation2 + $0x18] sm:$0xff] %v833
      %846 = vst [vmem:[#allocation2 + $0x20] sm:$0xff] %v834
      %847 = vst [vmem:[#allocation2 + $0x28] sm:$0xff] %v835
      %848 = vst [vmem:[#allocation2 + $0x30] sm:$0xff] %v836
      %849 = vst [vmem:[#allocation2 + $0x38] sm:$0xff] %v837
      %850 = vst [vmem:[#allocation2 + $0x40] sm:$0xff] %v838
      %851 = vst [vmem:[#allocation2 + $0x48] sm:$0xff] %v839
      %852 = vst [vmem:[#allocation2 + $0x50] sm:$0xff] %v840
      %853 = vst [vmem:[#allocation2 + $0x58] sm:$0xff] %v841
      %v854 = vld [vmem:[#allocation2] sm:$0xff]
      %v855 = vld [vmem:[#allocation2 + $0x8] sm:$0xff]
      %v856 = vld [vmem:[#allocation2 + $0x10] sm:$0xff]
      %v857 = vld [vmem:[#allocation2 + $0x18] sm:$0xff]
      %v858 = vld [vmem:[#allocation2 + $0x20] sm:$0xff]
      %v859 = vld [vmem:[#allocation2 + $0x28] sm:$0xff]
      %v860 = vld [vmem:[#allocation2 + $0x30] sm:$0xff]
      %v861 = vld [vmem:[#allocation2 + $0x38] sm:$0xff]
      %v862 = vld [vmem:[#allocation2 + $0x40] sm:$0xff]
      %v863 = vld [vmem:[#allocation2 + $0x48] sm:$0xff]
      %v864 = vld [vmem:[#allocation2 + $0x50] sm:$0xff]
      %v865 = vld [vmem:[#allocation2 + $0x58] sm:$0xff]
      %s866 = sld [smem:[#allocation7 + $0x9]]
      %s867 = scalar_lea.vmem %s237, 432
      %v868 = vld [vmem:[%s867] sm:$0xff]
      %v869 = vld [vmem:[%s867 + $0x8] sm:$0xff]
      %v870 = vld [vmem:[%s867 + $0x10] sm:$0xff]
      %v871 = vld [vmem:[%s867 + $0x18] sm:$0xff]
      %v872 = vld [vmem:[%s867 + $0x20] sm:$0xff]
      %v873 = vld [vmem:[%s867 + $0x28] sm:$0xff]
      %v874 = vunpack.c.l.bf16 %v868
      %v875 = vunpack.c.h.bf16 %v868
      %v876 = vunpack.c.l.bf16 %v869
      %v877 = vunpack.c.h.bf16 %v869
      %v878 = vunpack.c.l.bf16 %v870
      %v879 = vunpack.c.h.bf16 %v870
      %v880 = vunpack.c.l.bf16 %v871
      %v881 = vunpack.c.h.bf16 %v871
      %v882 = vunpack.c.l.bf16 %v872
      %v883 = vunpack.c.h.bf16 %v872
      %v884 = vunpack.c.l.bf16 %v873
      %v885 = vunpack.c.h.bf16 %v873
      %v886 = vstv %s866
      %v887 = vmul.f32 %v886, %v874
      %v888 = vmul.f32 %v886, %v875
      %v889 = vmul.f32 %v886, %v876
      %v890 = vmul.f32 %v886, %v877
      %v891 = vmul.f32 %v886, %v878
      %v892 = vmul.f32 %v886, %v879
      %v893 = vmul.f32 %v886, %v880
      %v894 = vmul.f32 %v886, %v881
      %v895 = vmul.f32 %v886, %v882
      %v896 = vmul.f32 %v886, %v883
      %v897 = vmul.f32 %v886, %v884
      %v898 = vmul.f32 %v886, %v885
      %v899 = vadd.f32 %v854, %v887
      %v900 = vadd.f32 %v855, %v888
      %v901 = vadd.f32 %v856, %v889
      %v902 = vadd.f32 %v857, %v890
      %v903 = vadd.f32 %v858, %v891
      %v904 = vadd.f32 %v859, %v892
      %v905 = vadd.f32 %v860, %v893
      %v906 = vadd.f32 %v861, %v894
      %v907 = vadd.f32 %v862, %v895
      %v908 = vadd.f32 %v863, %v896
      %v909 = vadd.f32 %v864, %v897
      %v910 = vadd.f32 %v865, %v898
      %911 = vst [vmem:[#allocation2] sm:$0xff] %v899
      %912 = vst [vmem:[#allocation2 + $0x8] sm:$0xff] %v900
      %913 = vst [vmem:[#allocation2 + $0x10] sm:$0xff] %v901
      %914 = vst [vmem:[#allocation2 + $0x18] sm:$0xff] %v902
      %915 = vst [vmem:[#allocation2 + $0x20] sm:$0xff] %v903
      %916 = vst [vmem:[#allocation2 + $0x28] sm:$0xff] %v904
      %917 = vst [vmem:[#allocation2 + $0x30] sm:$0xff] %v905
      %918 = vst [vmem:[#allocation2 + $0x38] sm:$0xff] %v906
      %919 = vst [vmem:[#allocation2 + $0x40] sm:$0xff] %v907
      %920 = vst [vmem:[#allocation2 + $0x48] sm:$0xff] %v908
      %921 = vst [vmem:[#allocation2 + $0x50] sm:$0xff] %v909
      %922 = vst [vmem:[#allocation2 + $0x58] sm:$0xff] %v910
      %v923 = vld [vmem:[#allocation2] sm:$0xff]
      %v924 = vld [vmem:[#allocation2 + $0x8] sm:$0xff]
      %v925 = vld [vmem:[#allocation2 + $0x10] sm:$0xff]
      %v926 = vld [vmem:[#allocation2 + $0x18] sm:$0xff]
      %v927 = vld [vmem:[#allocation2 + $0x20] sm:$0xff]
      %v928 = vld [vmem:[#allocation2 + $0x28] sm:$0xff]
      %v929 = vld [vmem:[#allocation2 + $0x30] sm:$0xff]
      %v930 = vld [vmem:[#allocation2 + $0x38] sm:$0xff]
      %v931 = vld [vmem:[#allocation2 + $0x40] sm:$0xff]
      %v932 = vld [vmem:[#allocation2 + $0x48] sm:$0xff]
      %v933 = vld [vmem:[#allocation2 + $0x50] sm:$0xff]
      %v934 = vld [vmem:[#allocation2 + $0x58] sm:$0xff]
      %s935 = sld [smem:[#allocation7 + $0xa]]
      %s936 = scalar_lea.vmem %s237, 480
      %v937 = vld [vmem:[%s936] sm:$0xff]
      %v938 = vld [vmem:[%s936 + $0x8] sm:$0xff]
      %v939 = vld [vmem:[%s936 + $0x10] sm:$0xff]
      %v940 = vld [vmem:[%s936 + $0x18] sm:$0xff]
      %v941 = vld [vmem:[%s936 + $0x20] sm:$0xff]
      %v942 = vld [vmem:[%s936 + $0x28] sm:$0xff]
      %v943 = vunpack.c.l.bf16 %v937
      %v944 = vunpack.c.h.bf16 %v937
      %v945 = vunpack.c.l.bf16 %v938
      %v946 = vunpack.c.h.bf16 %v938
      %v947 = vunpack.c.l.bf16 %v939
      %v948 = vunpack.c.h.bf16 %v939
      %v949 = vunpack.c.l.bf16 %v940
      %v950 = vunpack.c.h.bf16 %v940
      %v951 = vunpack.c.l.bf16 %v941
      %v952 = vunpack.c.h.bf16 %v941
      %v953 = vunpack.c.l.bf16 %v942
      %v954 = vunpack.c.h.bf16 %v942
      %v955 = vstv %s935
      %v956 = vmul.f32 %v955, %v943
      %v957 = vmul.f32 %v955, %v944
      %v958 = vmul.f32 %v955, %v945
      %v959 = vmul.f32 %v955, %v946
      %v960 = vmul.f32 %v955, %v947
      %v961 = vmul.f32 %v955, %v948
      %v962 = vmul.f32 %v955, %v949
      %v963 = vmul.f32 %v955, %v950
      %v964 = vmul.f32 %v955, %v951
      %v965 = vmul.f32 %v955, %v952
      %v966 = vmul.f32 %v955, %v953
      %v967 = vmul.f32 %v955, %v954
      %v968 = vadd.f32 %v923, %v956
      %v969 = vadd.f32 %v924, %v957
      %v970 = vadd.f32 %v925, %v958
      %v971 = vadd.f32 %v926, %v959
      %v972 = vadd.f32 %v927, %v960
      %v973 = vadd.f32 %v928, %v961
      %v974 = vadd.f32 %v929, %v962
      %v975 = vadd.f32 %v930, %v963
      %v976 = vadd.f32 %v931, %v964
      %v977 = vadd.f32 %v932, %v965
      %v978 = vadd.f32 %v933, %v966
      %v979 = vadd.f32 %v934, %v967
      %980 = vst [vmem:[#allocation2] sm:$0xff] %v968
      %981 = vst [vmem:[#allocation2 + $0x8] sm:$0xff] %v969
      %982 = vst [vmem:[#allocation2 + $0x10] sm:$0xff] %v970
      %983 = vst [vmem:[#allocation2 + $0x18] sm:$0xff] %v971
      %984 = vst [vmem:[#allocation2 + $0x20] sm:$0xff] %v972
      %985 = vst [vmem:[#allocation2 + $0x28] sm:$0xff] %v973
      %986 = vst [vmem:[#allocation2 + $0x30] sm:$0xff] %v974
      %987 = vst [vmem:[#allocation2 + $0x38] sm:$0xff] %v975
      %988 = vst [vmem:[#allocation2 + $0x40] sm:$0xff] %v976
      %989 = vst [vmem:[#allocation2 + $0x48] sm:$0xff] %v977
      %990 = vst [vmem:[#allocation2 + $0x50] sm:$0xff] %v978
      %991 = vst [vmem:[#allocation2 + $0x58] sm:$0xff] %v979
      %v992 = vld [vmem:[#allocation2] sm:$0xff]
      %v993 = vld [vmem:[#allocation2 + $0x8] sm:$0xff]
      %v994 = vld [vmem:[#allocation2 + $0x10] sm:$0xff]
      %v995 = vld [vmem:[#allocation2 + $0x18] sm:$0xff]
      %v996 = vld [vmem:[#allocation2 + $0x20] sm:$0xff]
      %v997 = vld [vmem:[#allocation2 + $0x28] sm:$0xff]
      %v998 = vld [vmem:[#allocation2 + $0x30] sm:$0xff]
      %v999 = vld [vmem:[#allocation2 + $0x38] sm:$0xff]
      %v1000 = vld [vmem:[#allocation2 + $0x40] sm:$0xff]
      %v1001 = vld [vmem:[#allocation2 + $0x48] sm:$0xff]
      %v1002 = vld [vmem:[#allocation2 + $0x50] sm:$0xff]
      %v1003 = vld [vmem:[#allocation2 + $0x58] sm:$0xff]
      %s1004 = sld [smem:[#allocation7 + $0xb]]
      %s1005 = scalar_lea.vmem %s237, 528
      %v1006 = vld [vmem:[%s1005] sm:$0xff]
      %v1007 = vld [vmem:[%s1005 + $0x8] sm:$0xff]
      %v1008 = vld [vmem:[%s1005 + $0x10] sm:$0xff]
      %v1009 = vld [vmem:[%s1005 + $0x18] sm:$0xff]
      %v1010 = vld [vmem:[%s1005 + $0x20] sm:$0xff]
      %v1011 = vld [vmem:[%s1005 + $0x28] sm:$0xff]
      %v1012 = vunpack.c.l.bf16 %v1006
      %v1013 = vunpack.c.h.bf16 %v1006
      %v1014 = vunpack.c.l.bf16 %v1007
      %v1015 = vunpack.c.h.bf16 %v1007
      %v1016 = vunpack.c.l.bf16 %v1008
      %v1017 = vunpack.c.h.bf16 %v1008
      %v1018 = vunpack.c.l.bf16 %v1009
      %v1019 = vunpack.c.h.bf16 %v1009
      %v1020 = vunpack.c.l.bf16 %v1010
      %v1021 = vunpack.c.h.bf16 %v1010
      %v1022 = vunpack.c.l.bf16 %v1011
      %v1023 = vunpack.c.h.bf16 %v1011
      %v1024 = vstv %s1004
      %v1025 = vmul.f32 %v1024, %v1012
      %v1026 = vmul.f32 %v1024, %v1013
      %v1027 = vmul.f32 %v1024, %v1014
      %v1028 = vmul.f32 %v1024, %v1015
      %v1029 = vmul.f32 %v1024, %v1016
      %v1030 = vmul.f32 %v1024, %v1017
      %v1031 = vmul.f32 %v1024, %v1018
      %v1032 = vmul.f32 %v1024, %v1019
      %v1033 = vmul.f32 %v1024, %v1020
      %v1034 = vmul.f32 %v1024, %v1021
      %v1035 = vmul.f32 %v1024, %v1022
      %v1036 = vmul.f32 %v1024, %v1023
      %v1037 = vadd.f32 %v992, %v1025
      %v1038 = vadd.f32 %v993, %v1026
      %v1039 = vadd.f32 %v994, %v1027
      %v1040 = vadd.f32 %v995, %v1028
      %v1041 = vadd.f32 %v996, %v1029
      %v1042 = vadd.f32 %v997, %v1030
      %v1043 = vadd.f32 %v998, %v1031
      %v1044 = vadd.f32 %v999, %v1032
      %v1045 = vadd.f32 %v1000, %v1033
      %v1046 = vadd.f32 %v1001, %v1034
      %v1047 = vadd.f32 %v1002, %v1035
      %v1048 = vadd.f32 %v1003, %v1036
      %1049 = vst [vmem:[#allocation2] sm:$0xff] %v1037
      %1050 = vst [vmem:[#allocation2 + $0x8] sm:$0xff] %v1038
      %1051 = vst [vmem:[#allocation2 + $0x10] sm:$0xff] %v1039
      %1052 = vst [vmem:[#allocation2 + $0x18] sm:$0xff] %v1040
      %1053 = vst [vmem:[#allocation2 + $0x20] sm:$0xff] %v1041
      %1054 = vst [vmem:[#allocation2 + $0x28] sm:$0xff] %v1042
      %1055 = vst [vmem:[#allocation2 + $0x30] sm:$0xff] %v1043
      %1056 = vst [vmem:[#allocation2 + $0x38] sm:$0xff] %v1044
      %1057 = vst [vmem:[#allocation2 + $0x40] sm:$0xff] %v1045
      %1058 = vst [vmem:[#allocation2 + $0x48] sm:$0xff] %v1046
      %1059 = vst [vmem:[#allocation2 + $0x50] sm:$0xff] %v1047
      %1060 = vst [vmem:[#allocation2 + $0x58] sm:$0xff] %v1048
      %v1061 = vld [vmem:[#allocation2] sm:$0xff]
      %v1062 = vld [vmem:[#allocation2 + $0x8] sm:$0xff]
      %v1063 = vld [vmem:[#allocation2 + $0x10] sm:$0xff]
      %v1064 = vld [vmem:[#allocation2 + $0x18] sm:$0xff]
      %v1065 = vld [vmem:[#allocation2 + $0x20] sm:$0xff]
      %v1066 = vld [vmem:[#allocation2 + $0x28] sm:$0xff]
      %v1067 = vld [vmem:[#allocation2 + $0x30] sm:$0xff]
      %v1068 = vld [vmem:[#allocation2 + $0x38] sm:$0xff]
      %v1069 = vld [vmem:[#allocation2 + $0x40] sm:$0xff]
      %v1070 = vld [vmem:[#allocation2 + $0x48] sm:$0xff]
      %v1071 = vld [vmem:[#allocation2 + $0x50] sm:$0xff]
      %v1072 = vld [vmem:[#allocation2 + $0x58] sm:$0xff]
      %s1073 = sld [smem:[#allocation7 + $0xc]]
      %s1074 = scalar_lea.vmem %s237, 576
      %v1075 = vld [vmem:[%s1074] sm:$0xff]
      %v1076 = vld [vmem:[%s1074 + $0x8] sm:$0xff]
      %v1077 = vld [vmem:[%s1074 + $0x10] sm:$0xff]
      %v1078 = vld [vmem:[%s1074 + $0x18] sm:$0xff]
      %v1079 = vld [vmem:[%s1074 + $0x20] sm:$0xff]
      %v1080 = vld [vmem:[%s1074 + $0x28] sm:$0xff]
      %v1081 = vunpack.c.l.bf16 %v1075
      %v1082 = vunpack.c.h.bf16 %v1075
      %v1083 = vunpack.c.l.bf16 %v1076
      %v1084 = vunpack.c.h.bf16 %v1076
      %v1085 = vunpack.c.l.bf16 %v1077
      %v1086 = vunpack.c.h.bf16 %v1077
      %v1087 = vunpack.c.l.bf16 %v1078
      %v1088 = vunpack.c.h.bf16 %v1078
      %v1089 = vunpack.c.l.bf16 %v1079
      %v1090 = vunpack.c.h.bf16 %v1079
      %v1091 = vunpack.c.l.bf16 %v1080
      %v1092 = vunpack.c.h.bf16 %v1080
      %v1093 = vstv %s1073
      %v1094 = vmul.f32 %v1093, %v1081
      %v1095 = vmul.f32 %v1093, %v1082
      %v1096 = vmul.f32 %v1093, %v1083
      %v1097 = vmul.f32 %v1093, %v1084
      %v1098 = vmul.f32 %v1093, %v1085
      %v1099 = vmul.f32 %v1093, %v1086
      %v1100 = vmul.f32 %v1093, %v1087
      %v1101 = vmul.f32 %v1093, %v1088
      %v1102 = vmul.f32 %v1093, %v1089
      %v1103 = vmul.f32 %v1093, %v1090
      %v1104 = vmul.f32 %v1093, %v1091
      %v1105 = vmul.f32 %v1093, %v1092
      %v1106 = vadd.f32 %v1061, %v1094
      %v1107 = vadd.f32 %v1062, %v1095
      %v1108 = vadd.f32 %v1063, %v1096
      %v1109 = vadd.f32 %v1064, %v1097
      %v1110 = vadd.f32 %v1065, %v1098
      %v1111 = vadd.f32 %v1066, %v1099
      %v1112 = vadd.f32 %v1067, %v1100
      %v1113 = vadd.f32 %v1068, %v1101
      %v1114 = vadd.f32 %v1069, %v1102
      %v1115 = vadd.f32 %v1070, %v1103
      %v1116 = vadd.f32 %v1071, %v1104
      %v1117 = vadd.f32 %v1072, %v1105
      %1118 = vst [vmem:[#allocation2] sm:$0xff] %v1106
      %1119 = vst [vmem:[#allocation2 + $0x8] sm:$0xff] %v1107
      %1120 = vst [vmem:[#allocation2 + $0x10] sm:$0xff] %v1108
      %1121 = vst [vmem:[#allocation2 + $0x18] sm:$0xff] %v1109
      %1122 = vst [vmem:[#allocation2 + $0x20] sm:$0xff] %v1110
      %1123 = vst [vmem:[#allocation2 + $0x28] sm:$0xff] %v1111
      %1124 = vst [vmem:[#allocation2 + $0x30] sm:$0xff] %v1112
      %1125 = vst [vmem:[#allocation2 + $0x38] sm:$0xff] %v1113
      %1126 = vst [vmem:[#allocation2 + $0x40] sm:$0xff] %v1114
      %1127 = vst [vmem:[#allocation2 + $0x48] sm:$0xff] %v1115
      %1128 = vst [vmem:[#allocation2 + $0x50] sm:$0xff] %v1116
      %1129 = vst [vmem:[#allocation2 + $0x58] sm:$0xff] %v1117
      %v1130 = vld [vmem:[%s5 + $0x500] sm:$0xff]
      %v1131 = vld [vmem:[#allocation2] sm:$0xff]
      %v1132 = vld [vmem:[#allocation2 + $0x8] sm:$0xff]
      %v1133 = vld [vmem:[#allocation2 + $0x10] sm:$0xff]
      %v1134 = vld [vmem:[#allocation2 + $0x18] sm:$0xff]
      %v1135 = vld [vmem:[#allocation2 + $0x20] sm:$0xff]
      %v1136 = vld [vmem:[#allocation2 + $0x28] sm:$0xff]
      %v1137 = vld [vmem:[#allocation2 + $0x30] sm:$0xff]
      %v1138 = vld [vmem:[#allocation2 + $0x38] sm:$0xff]
      %v1139 = vld [vmem:[#allocation2 + $0x40] sm:$0xff]
      %v1140 = vld [vmem:[#allocation2 + $0x48] sm:$0xff]
      %v1141 = vld [vmem:[#allocation2 + $0x50] sm:$0xff]
      %v1142 = vld [vmem:[#allocation2 + $0x58] sm:$0xff]
      %v1143 = vld [vmem:[%s5] sm:$0xff]
      %v1144 = vld [vmem:[%s5 + $0x8] sm:$0xff]
      %v1145 = vld [vmem:[%s5 + $0x10] sm:$0xff]
      %v1146 = vld [vmem:[%s5 + $0x18] sm:$0xff]
      %v1147 = vld [vmem:[%s5 + $0x20] sm:$0xff]
      %v1148 = vld [vmem:[%s5 + $0x28] sm:$0xff]
      %v1149 = vld [vmem:[%s5 + $0x30] sm:$0xff]
      %v1150 = vld [vmem:[%s5 + $0x38] sm:$0xff]
      %v1151 = vld [vmem:[%s5 + $0x40] sm:$0xff]
      %v1152 = vld [vmem:[%s5 + $0x48] sm:$0xff]
      %v1153 = vld [vmem:[%s5 + $0x50] sm:$0xff]
      %v1154 = vld [vmem:[%s5 + $0x58] sm:$0xff]
      %v1155 = vld [vmem:[%s5 + $0x60] sm:$0xff]
      %v1156 = vld [vmem:[%s5 + $0x68] sm:$0xff]
      %v1157 = vld [vmem:[%s5 + $0x70] sm:$0xff]
      %v1158 = vld [vmem:[%s5 + $0x78] sm:$0xff]
      %v1159 = vld [vmem:[%s5 + $0x80] sm:$0xff]
      %v1160 = vld [vmem:[%s5 + $0x88] sm:$0xff]
      %v1161 = vld [vmem:[%s5 + $0x90] sm:$0xff]
      %v1162 = vld [vmem:[%s5 + $0x98] sm:$0xff]
      %v1163 = vld [vmem:[%s5 + $0xa0] sm:$0xff]
      %v1164 = vld [vmem:[%s5 + $0xa8] sm:$0xff]
      %v1165 = vld [vmem:[%s5 + $0xb0] sm:$0xff]
      %v1166 = vld [vmem:[%s5 + $0xb8] sm:$0xff]
      %v1167 = vld [vmem:[%s5 + $0xc0] sm:$0xff]
      %v1168 = vld [vmem:[%s5 + $0xc8] sm:$0xff]
      %v1169 = vld [vmem:[%s5 + $0xd0] sm:$0xff]
      %v1170 = vld [vmem:[%s5 + $0xd8] sm:$0xff]
      %v1171 = vld [vmem:[%s5 + $0xe0] sm:$0xff]
      %v1172 = vld [vmem:[%s5 + $0xe8] sm:$0xff]
      %v1173 = vld [vmem:[%s5 + $0xf0] sm:$0xff]
      %v1174 = vld [vmem:[%s5 + $0xf8] sm:$0xff]
      %v1175 = vld [vmem:[%s5 + $0x100] sm:$0xff]
      %v1176 = vld [vmem:[%s5 + $0x108] sm:$0xff]
      %v1177 = vld [vmem:[%s5 + $0x110] sm:$0xff]
      %v1178 = vld [vmem:[%s5 + $0x118] sm:$0xff]
      %v1179 = vld [vmem:[%s5 + $0x120] sm:$0xff]
      %v1180 = vld [vmem:[%s5 + $0x128] sm:$0xff]
      %v1181 = vld [vmem:[%s5 + $0x130] sm:$0xff]
      %v1182 = vld [vmem:[%s5 + $0x138] sm:$0xff]
      %v1183 = vld [vmem:[%s5 + $0x140] sm:$0xff]
      %v1184 = vld [vmem:[%s5 + $0x148] sm:$0xff]
      %v1185 = vld [vmem:[%s5 + $0x150] sm:$0xff]
      %v1186 = vld [vmem:[%s5 + $0x158] sm:$0xff]
      %v1187 = vld [vmem:[%s5 + $0x160] sm:$0xff]
      %v1188 = vld [vmem:[%s5 + $0x168] sm:$0xff]
      %v1189 = vld [vmem:[%s5 + $0x170] sm:$0xff]
      %v1190 = vld [vmem:[%s5 + $0x178] sm:$0xff]
      %v1191 = vld [vmem:[%s5 + $0x180] sm:$0xff]
      %v1192 = vld [vmem:[%s5 + $0x188] sm:$0xff]
      %v1193 = vld [vmem:[%s5 + $0x190] sm:$0xff]
      %v1194 = vld [vmem:[%s5 + $0x198] sm:$0xff]
      %v1195 = vld [vmem:[%s5 + $0x1a0] sm:$0xff]
      %v1196 = vld [vmem:[%s5 + $0x1a8] sm:$0xff]
      %v1197 = vld [vmem:[%s5 + $0x1b0] sm:$0xff]
      %v1198 = vld [vmem:[%s5 + $0x1b8] sm:$0xff]
      %v1199 = vld [vmem:[%s5 + $0x1c0] sm:$0xff]
      %v1200 = vld [vmem:[%s5 + $0x1c8] sm:$0xff]
      %v1201 = vld [vmem:[%s5 + $0x1d0] sm:$0xff]
      %v1202 = vld [vmem:[%s5 + $0x1d8] sm:$0xff]
      %v1203 = vld [vmem:[%s5 + $0x1e0] sm:$0xff]
      %v1204 = vld [vmem:[%s5 + $0x1e8] sm:$0xff]
      %v1205 = vld [vmem:[%s5 + $0x1f0] sm:$0xff]
      %v1206 = vld [vmem:[%s5 + $0x1f8] sm:$0xff]
      %v1207 = vld [vmem:[%s5 + $0x200] sm:$0xff]
      %v1208 = vld [vmem:[%s5 + $0x208] sm:$0xff]
      %v1209 = vld [vmem:[%s5 + $0x210] sm:$0xff]
      %v1210 = vld [vmem:[%s5 + $0x218] sm:$0xff]
      %v1211 = vld [vmem:[%s5 + $0x220] sm:$0xff]
      %v1212 = vld [vmem:[%s5 + $0x228] sm:$0xff]
      %v1213 = vld [vmem:[%s5 + $0x230] sm:$0xff]
      %v1214 = vld [vmem:[%s5 + $0x238] sm:$0xff]
      %v1215 = vld [vmem:[%s5 + $0x240] sm:$0xff]
      %v1216 = vld [vmem:[%s5 + $0x248] sm:$0xff]
      %v1217 = vld [vmem:[%s5 + $0x250] sm:$0xff]
      %v1218 = vld [vmem:[%s5 + $0x258] sm:$0xff]
      %v1219 = vld [vmem:[%s5 + $0x260] sm:$0xff]
      %v1220 = vld [vmem:[%s5 + $0x268] sm:$0xff]
      %v1221 = vld [vmem:[%s5 + $0x270] sm:$0xff]
      %v1222 = vld [vmem:[%s5 + $0x278] sm:$0xff]
      %v1223 = vld [vmem:[%s5 + $0x280] sm:$0xff]
      %v1224 = vld [vmem:[%s5 + $0x288] sm:$0xff]
      %v1225 = vld [vmem:[%s5 + $0x290] sm:$0xff]
      %v1226 = vld [vmem:[%s5 + $0x298] sm:$0xff]
      %v1227 = vld [vmem:[%s5 + $0x2a0] sm:$0xff]
      %v1228 = vld [vmem:[%s5 + $0x2a8] sm:$0xff]
      %v1229 = vld [vmem:[%s5 + $0x2b0] sm:$0xff]
      %v1230 = vld [vmem:[%s5 + $0x2b8] sm:$0xff]
      %v1231 = vld [vmem:[%s5 + $0x2c0] sm:$0xff]
      %v1232 = vld [vmem:[%s5 + $0x2c8] sm:$0xff]
      %v1233 = vld [vmem:[%s5 + $0x2d0] sm:$0xff]
      %v1234 = vld [vmem:[%s5 + $0x2d8] sm:$0xff]
      %v1235 = vld [vmem:[%s5 + $0x2e0] sm:$0xff]
      %v1236 = vld [vmem:[%s5 + $0x2e8] sm:$0xff]
      %v1237 = vld [vmem:[%s5 + $0x2f0] sm:$0xff]
      %v1238 = vld [vmem:[%s5 + $0x2f8] sm:$0xff]
      %v1239 = vlaneseq
      %v1240 = vshrl.u32 %v1239, 7
      %v1241 = vsub.s32 0, %v1240
      %v1242 = vrot.slane %v1130, %v1241
      %1243 = vmatprep.subr.mxu0 0.0
      %1244 = vmatpush1.msra.mxu0 %v1143
      %1245 = vmatprep.subr.mxu0 0.0
      %1246 = vmatpush1.msra.mxu0 %v1144
      %1247 = vmatprep.subr.mxu0 0.0
      %1248 = vmatpush1.msra.mxu0 %v1145
      %1249 = vmatprep.subr.mxu0 0.0
      %1250 = vmatpush1.msra.mxu0 %v1146
      %1251 = vmatprep.subr.mxu0 0.0
      %1252 = vmatpush1.msra.mxu0 %v1147
      %1253 = vmatprep.subr.mxu0 0.0
      %1254 = vmatpush1.msra.mxu0 %v1148
      %1255 = vmatprep.subr.mxu0 0.0
      %1256 = vmatpush1.msra.mxu0 %v1149
      %1257 = vmatprep.subr.mxu0 0.0
      %1258 = vmatpush1.msra.mxu0 %v1150
      %1259 = vmatprep.subr.mxu0 0.0
      %1260 = vmatpush1.msra.mxu0 %v1151
      %1261 = vmatprep.subr.mxu0 0.0
      %1262 = vmatpush1.msra.mxu0 %v1152
      %1263 = vmatprep.subr.mxu0 0.0
      %1264 = vmatpush1.msra.mxu0 %v1153
      %1265 = vmatprep.subr.mxu0 0.0
      %1266 = vmatpush1.msra.mxu0 %v1154
      %1267 = vmatprep.subr.mxu0 0.0
      %1268 = vmatpush1.msra.mxu0 %v1155
      %1269 = vmatprep.subr.mxu0 0.0
      %1270 = vmatpush1.msra.mxu0 %v1156
      %1271 = vmatprep.subr.mxu0 0.0
      %1272 = vmatpush1.msra.mxu0 %v1157
      %1273 = vmatprep.subr.mxu0 0.0
      %1274 = vmatpush1.msra.mxu0 %v1158
      %1275 = vmatprep.subr.mxu0 0.0
      %1276 = vmatpush1.msra.mxu0 %v1159
      %1277 = vmatprep.subr.mxu0 0.0
      %1278 = vmatpush1.msra.mxu0 %v1160
      %1279 = vmatprep.subr.mxu0 0.0
      %1280 = vmatpush1.msra.mxu0 %v1161
      %1281 = vmatprep.subr.mxu0 0.0
      %1282 = vmatpush1.msra.mxu0 %v1162
      %1283 = vmatprep.subr.mxu0 0.0
      %1284 = vmatpush1.msra.mxu0 %v1163
      %1285 = vmatprep.subr.mxu0 0.0
      %1286 = vmatpush1.msra.mxu0 %v1164
      %1287 = vmatprep.subr.mxu0 0.0
      %1288 = vmatpush1.msra.mxu0 %v1165
      %1289 = vmatprep.subr.mxu0 0.0
      %1290 = vmatpush1.msra.mxu0 %v1166
      %1291 = vmatprep.subr.mxu0 0.0
      %1292 = vmatpush1.msra.mxu0 %v1167
      %1293 = vmatprep.subr.mxu0 0.0
      %1294 = vmatpush1.msra.mxu0 %v1168
      %1295 = vmatprep.subr.mxu0 0.0
      %1296 = vmatpush1.msra.mxu0 %v1169
      %1297 = vmatprep.subr.mxu0 0.0
      %1298 = vmatpush1.msra.mxu0 %v1170
      %1299 = vmatprep.subr.mxu0 0.0
      %1300 = vmatpush1.msra.mxu0 %v1171
      %1301 = vmatprep.subr.mxu0 0.0
      %1302 = vmatpush1.msra.mxu0 %v1172
      %1303 = vmatprep.subr.mxu0 0.0
      %1304 = vmatpush1.msra.mxu0 %v1173
      %1305 = vmatprep.subr.mxu0 0.0
      %1306 = vmatpush1.msra.mxu0 %v1174
      %1307 = vmatprep.mubr.f32.mxu0 %v1132
      %1308 = vmatmul.mubr.f32.gmra.mrb[0].mxu0 %v1131
      %v1309 = vpop.f32.mrb[0].mxu0
      %v1310 = vadd.f32 %v1242, %v1309
      %v1311 = vpop.f32.mrb[0].mxu0
      %1312 = vmatprep.mubr.f32.mxu0 %v1138
      %1313 = vmatmul.mubr.f32.gmra.mrb[0].mxu0 %v1137
      %v1314 = vpop.f32.mrb[0].mxu0
      %v1315 = vadd.f32 %v1242, %v1314
      %v1316 = vpop.f32.mrb[0].mxu0
      %1317 = vdwg.mxu0
      %1318 = vmatprep.subr.mxu0 0.0
      %1319 = vmatpush1.msra.mxu0 %v1175
      %1320 = vmatprep.subr.mxu0 0.0
      %1321 = vmatpush1.msra.mxu0 %v1176
      %1322 = vmatprep.subr.mxu0 0.0
      %1323 = vmatpush1.msra.mxu0 %v1177
      %1324 = vmatprep.subr.mxu0 0.0
      %1325 = vmatpush1.msra.mxu0 %v1178
      %1326 = vmatprep.subr.mxu0 0.0
      %1327 = vmatpush1.msra.mxu0 %v1179
      %1328 = vmatprep.subr.mxu0 0.0
      %1329 = vmatpush1.msra.mxu0 %v1180
      %1330 = vmatprep.subr.mxu0 0.0
      %1331 = vmatpush1.msra.mxu0 %v1181
      %1332 = vmatprep.subr.mxu0 0.0
      %1333 = vmatpush1.msra.mxu0 %v1182
      %1334 = vmatprep.subr.mxu0 0.0
      %1335 = vmatpush1.msra.mxu0 %v1183
      %1336 = vmatprep.subr.mxu0 0.0
      %1337 = vmatpush1.msra.mxu0 %v1184
      %1338 = vmatprep.subr.mxu0 0.0
      %1339 = vmatpush1.msra.mxu0 %v1185
      %1340 = vmatprep.subr.mxu0 0.0
      %1341 = vmatpush1.msra.mxu0 %v1186
      %1342 = vmatprep.subr.mxu0 0.0
      %1343 = vmatpush1.msra.mxu0 %v1187
      %1344 = vmatprep.subr.mxu0 0.0
      %1345 = vmatpush1.msra.mxu0 %v1188
      %1346 = vmatprep.subr.mxu0 0.0
      %1347 = vmatpush1.msra.mxu0 %v1189
      %1348 = vmatprep.subr.mxu0 0.0
      %1349 = vmatpush1.msra.mxu0 %v1190
      %1350 = vmatprep.subr.mxu0 0.0
      %1351 = vmatpush1.msra.mxu0 %v1191
      %1352 = vmatprep.subr.mxu0 0.0
      %1353 = vmatpush1.msra.mxu0 %v1192
      %1354 = vmatprep.subr.mxu0 0.0
      %1355 = vmatpush1.msra.mxu0 %v1193
      %1356 = vmatprep.subr.mxu0 0.0
      %1357 = vmatpush1.msra.mxu0 %v1194
      %1358 = vmatprep.subr.mxu0 0.0
      %1359 = vmatpush1.msra.mxu0 %v1195
      %1360 = vmatprep.subr.mxu0 0.0
      %1361 = vmatpush1.msra.mxu0 %v1196
      %1362 = vmatprep.subr.mxu0 0.0
      %1363 = vmatpush1.msra.mxu0 %v1197
      %1364 = vmatprep.subr.mxu0 0.0
      %1365 = vmatpush1.msra.mxu0 %v1198
      %1366 = vmatprep.subr.mxu0 0.0
      %1367 = vmatpush1.msra.mxu0 %v1199
      %1368 = vmatprep.subr.mxu0 0.0
      %1369 = vmatpush1.msra.mxu0 %v1200
      %1370 = vmatprep.subr.mxu0 0.0
      %1371 = vmatpush1.msra.mxu0 %v1201
      %1372 = vmatprep.subr.mxu0 0.0
      %1373 = vmatpush1.msra.mxu0 %v1202
      %1374 = vmatprep.subr.mxu0 0.0
      %1375 = vmatpush1.msra.mxu0 %v1203
      %1376 = vmatprep.subr.mxu0 0.0
      %1377 = vmatpush1.msra.mxu0 %v1204
      %1378 = vmatprep.subr.mxu0 0.0
      %1379 = vmatpush1.msra.mxu0 %v1205
      %1380 = vmatprep.subr.mxu0 0.0
      %1381 = vmatpush1.msra.mxu0 %v1206
      %1382 = vmatprep.mubr.f32.mxu0 %v1134
      %1383 = vmatmul.mubr.f32.gmra.mrb[0].mxu0 %v1133
      %v1384 = vpop.f32.mrb[0].mxu0
      %v1385 = vadd.f32 %v1310, %v1384
      %v1386 = vpop.f32.mrb[0].mxu0
      %1387 = vmatprep.mubr.f32.mxu0 %v1140
      %1388 = vmatmul.mubr.f32.gmra.mrb[0].mxu0 %v1139
      %v1389 = vpop.f32.mrb[0].mxu0
      %v1390 = vadd.f32 %v1315, %v1389
      %v1391 = vpop.f32.mrb[0].mxu0
      %1392 = vdwg.mxu0
      %1393 = vmatprep.subr.mxu0 0.0
      %1394 = vmatpush1.msra.mxu0 %v1207
      %1395 = vmatprep.subr.mxu0 0.0
      %1396 = vmatpush1.msra.mxu0 %v1208
      %1397 = vmatprep.subr.mxu0 0.0
      %1398 = vmatpush1.msra.mxu0 %v1209
      %1399 = vmatprep.subr.mxu0 0.0
      %1400 = vmatpush1.msra.mxu0 %v1210
      %1401 = vmatprep.subr.mxu0 0.0
      %1402 = vmatpush1.msra.mxu0 %v1211
      %1403 = vmatprep.subr.mxu0 0.0
      %1404 = vmatpush1.msra.mxu0 %v1212
      %1405 = vmatprep.subr.mxu0 0.0
      %1406 = vmatpush1.msra.mxu0 %v1213
      %1407 = vmatprep.subr.mxu0 0.0
      %1408 = vmatpush1.msra.mxu0 %v1214
      %1409 = vmatprep.subr.mxu0 0.0
      %1410 = vmatpush1.msra.mxu0 %v1215
      %1411 = vmatprep.subr.mxu0 0.0
      %1412 = vmatpush1.msra.mxu0 %v1216
      %1413 = vmatprep.subr.mxu0 0.0
      %1414 = vmatpush1.msra.mxu0 %v1217
      %1415 = vmatprep.subr.mxu0 0.0
      %1416 = vmatpush1.msra.mxu0 %v1218
      %1417 = vmatprep.subr.mxu0 0.0
      %1418 = vmatpush1.msra.mxu0 %v1219
      %1419 = vmatprep.subr.mxu0 0.0
      %1420 = vmatpush1.msra.mxu0 %v1220
      %1421 = vmatprep.subr.mxu0 0.0
      %1422 = vmatpush1.msra.mxu0 %v1221
      %1423 = vmatprep.subr.mxu0 0.0
      %1424 = vmatpush1.msra.mxu0 %v1222
      %1425 = vmatprep.subr.mxu0 0.0
      %1426 = vmatpush1.msra.mxu0 %v1223
      %1427 = vmatprep.subr.mxu0 0.0
      %1428 = vmatpush1.msra.mxu0 %v1224
      %1429 = vmatprep.subr.mxu0 0.0
      %1430 = vmatpush1.msra.mxu0 %v1225
      %1431 = vmatprep.subr.mxu0 0.0
      %1432 = vmatpush1.msra.mxu0 %v1226
      %1433 = vmatprep.subr.mxu0 0.0
      %1434 = vmatpush1.msra.mxu0 %v1227
      %1435 = vmatprep.subr.mxu0 0.0
      %1436 = vmatpush1.msra.mxu0 %v1228
      %1437 = vmatprep.subr.mxu0 0.0
      %1438 = vmatpush1.msra.mxu0 %v1229
      %1439 = vmatprep.subr.mxu0 0.0
      %1440 = vmatpush1.msra.mxu0 %v1230
      %1441 = vmatprep.subr.mxu0 0.0
      %1442 = vmatpush1.msra.mxu0 %v1231
      %1443 = vmatprep.subr.mxu0 0.0
      %1444 = vmatpush1.msra.mxu0 %v1232
      %1445 = vmatprep.subr.mxu0 0.0
      %1446 = vmatpush1.msra.mxu0 %v1233
      %1447 = vmatprep.subr.mxu0 0.0
      %1448 = vmatpush1.msra.mxu0 %v1234
      %1449 = vmatprep.subr.mxu0 0.0
      %1450 = vmatpush1.msra.mxu0 %v1235
      %1451 = vmatprep.subr.mxu0 0.0
      %1452 = vmatpush1.msra.mxu0 %v1236
      %1453 = vmatprep.subr.mxu0 0.0
      %1454 = vmatpush1.msra.mxu0 %v1237
      %1455 = vmatprep.subr.mxu0 0.0
      %1456 = vmatpush1.msra.mxu0 %v1238
      %1457 = vmatprep.mubr.f32.mxu0 %v1136
      %1458 = vmatmul.mubr.f32.gmra.mrb[0].mxu0 %v1135
      %v1459 = vpop.f32.mrb[0].mxu0
      %v1460 = vadd.f32 %v1385, %v1459
      %v1461 = vpop.f32.mrb[0].mxu0
      %1462 = vmatprep.mubr.f32.mxu0 %v1142
      %1463 = vmatmul.mubr.f32.gmra.mrb[0].mxu0 %v1141
      %v1464 = vpop.f32.mrb[0].mxu0
      %v1465 = vadd.f32 %v1390, %v1464
      %v1466 = vpop.f32.mrb[0].mxu0
      %1467 = vdwg.mxu0
      %v1468 = vmax.f32 %v1460, 0.0
      %v1469 = vmax.f32 %v1465, 0.0
      %v1470 = vld [vmem:[%s247] sm:$0xff]
      %v1471 = vld [vmem:[%s247 + $0x8] sm:$0xff]
      %v1472 = vld [vmem:[%s5 + $0x300] sm:$0xff]
      %v1473 = vld [vmem:[%s5 + $0x308] sm:$0xff]
      %v1474 = vld [vmem:[%s5 + $0x310] sm:$0xff]
      %v1475 = vld [vmem:[%s5 + $0x318] sm:$0xff]
      %v1476 = vld [vmem:[%s5 + $0x320] sm:$0xff]
      %v1477 = vld [vmem:[%s5 + $0x328] sm:$0xff]
      %v1478 = vld [vmem:[%s5 + $0x330] sm:$0xff]
      %v1479 = vld [vmem:[%s5 + $0x338] sm:$0xff]
      %v1480 = vld [vmem:[%s5 + $0x340] sm:$0xff]
      %v1481 = vld [vmem:[%s5 + $0x348] sm:$0xff]
      %v1482 = vld [vmem:[%s5 + $0x350] sm:$0xff]
      %v1483 = vld [vmem:[%s5 + $0x358] sm:$0xff]
      %v1484 = vld [vmem:[%s5 + $0x360] sm:$0xff]
      %v1485 = vld [vmem:[%s5 + $0x368] sm:$0xff]
      %v1486 = vld [vmem:[%s5 + $0x370] sm:$0xff]
      %v1487 = vld [vmem:[%s5 + $0x378] sm:$0xff]
      %v1488 = vlaneseq
      %v1489 = vshrl.u32 %v1488, 7
      %v1490 = vsub.s32 1, %v1489
      %v1491 = vrot.slane %v1130, %v1490
      %1492 = vmatprep.subr.mxu0 0.0
      %1493 = vmatpush1.msra.mxu0 %v1472
      %1494 = vmatprep.subr.mxu0 0.0
      %1495 = vmatpush1.msra.mxu0 %v1473
      %1496 = vmatprep.subr.mxu0 0.0
      %1497 = vmatpush1.msra.mxu0 %v1474
      %1498 = vmatprep.subr.mxu0 0.0
      %1499 = vmatpush1.msra.mxu0 %v1475
      %1500 = vmatprep.subr.mxu0 0.0
      %1501 = vmatpush1.msra.mxu0 %v1476
      %1502 = vmatprep.subr.mxu0 0.0
      %1503 = vmatpush1.msra.mxu0 %v1477
      %1504 = vmatprep.subr.mxu0 0.0
      %1505 = vmatpush1.msra.mxu0 %v1478
      %1506 = vmatprep.subr.mxu0 0.0
      %1507 = vmatpush1.msra.mxu0 %v1479
      %1508 = vmatprep.subr.mxu0 0.0
      %1509 = vmatpush1.msra.mxu0 %v1480
      %1510 = vmatprep.subr.mxu0 0.0
      %1511 = vmatpush1.msra.mxu0 %v1481
      %1512 = vmatprep.subr.mxu0 0.0
      %1513 = vmatpush1.msra.mxu0 %v1482
      %1514 = vmatprep.subr.mxu0 0.0
      %1515 = vmatpush1.msra.mxu0 %v1483
      %1516 = vmatprep.subr.mxu0 0.0
      %1517 = vmatpush1.msra.mxu0 %v1484
      %1518 = vmatprep.subr.mxu0 0.0
      %1519 = vmatpush1.msra.mxu0 %v1485
      %1520 = vmatprep.subr.mxu0 0.0
      %1521 = vmatpush1.msra.mxu0 %v1486
      %1522 = vmatprep.subr.mxu0 0.0
      %1523 = vmatpush1.msra.mxu0 %v1487
      %1524 = vmatprep.subr.mxu0 0.0
      %1525 = vmatpush1.msra.mxu0 0.0
      %1526 = vmatprep.subr.mxu0 0.0
      %1527 = vmatpush1.msra.mxu0 0.0
      %1528 = vmatprep.subr.mxu0 0.0
      %1529 = vmatpush1.msra.mxu0 0.0
      %1530 = vmatprep.subr.mxu0 0.0
      %1531 = vmatpush1.msra.mxu0 0.0
      %1532 = vmatprep.subr.mxu0 0.0
      %1533 = vmatpush1.msra.mxu0 0.0
      %1534 = vmatprep.subr.mxu0 0.0
      %1535 = vmatpush1.msra.mxu0 0.0
      %1536 = vmatprep.subr.mxu0 0.0
      %1537 = vmatpush1.msra.mxu0 0.0
      %1538 = vmatprep.subr.mxu0 0.0
      %1539 = vmatpush1.msra.mxu0 0.0
      %1540 = vmatprep.subr.mxu0 0.0
      %1541 = vmatpush1.msra.mxu0 0.0
      %1542 = vmatprep.subr.mxu0 0.0
      %1543 = vmatpush1.msra.mxu0 0.0
      %1544 = vmatprep.subr.mxu0 0.0
      %1545 = vmatpush1.msra.mxu0 0.0
      %1546 = vmatprep.subr.mxu0 0.0
      %1547 = vmatpush1.msra.mxu0 0.0
      %1548 = vmatprep.subr.mxu0 0.0
      %1549 = vmatpush1.msra.mxu0 0.0
      %1550 = vmatprep.subr.mxu0 0.0
      %1551 = vmatpush1.msra.mxu0 0.0
      %1552 = vmatprep.subr.mxu0 0.0
      %1553 = vmatpush1.msra.mxu0 0.0
      %1554 = vmatprep.subr.mxu0 0.0
      %1555 = vmatpush1.msra.mxu0 0.0
      %1556 = vmatprep.mubr.f32.mxu0 0.0
      %1557 = vmatmul.mubr.f32.gmra.mrb[0].mxu0 %v1470
      %v1558 = vpop.f32.mrb[0].mxu0
      %v1559 = vadd.f32 %v1491, %v1558
      %v1560 = vpop.f32.mrb[0].mxu0
      %1561 = vmatprep.mubr.f32.mxu0 0.0
      %1562 = vmatmul.mubr.f32.gmra.mrb[0].mxu0 %v1471
      %v1563 = vpop.f32.mrb[0].mxu0
      %v1564 = vadd.f32 %v1491, %v1563
      %v1565 = vpop.f32.mrb[0].mxu0
      %1566 = vdwg.mxu0
      %v1567 = vmax.f32 %v1559, 0.0
      %v1568 = vmax.f32 %v1564, 0.0
      %v1569 = vld [vmem:[%s5 + $0x380] sm:$0xff]
      %v1570 = vld [vmem:[%s5 + $0x388] sm:$0xff]
      %v1571 = vld [vmem:[%s5 + $0x390] sm:$0xff]
      %v1572 = vld [vmem:[%s5 + $0x398] sm:$0xff]
      %v1573 = vld [vmem:[%s5 + $0x3a0] sm:$0xff]
      %v1574 = vld [vmem:[%s5 + $0x3a8] sm:$0xff]
      %v1575 = vld [vmem:[%s5 + $0x3b0] sm:$0xff]
      %v1576 = vld [vmem:[%s5 + $0x3b8] sm:$0xff]
      %v1577 = vld [vmem:[%s5 + $0x3c0] sm:$0xff]
      %v1578 = vld [vmem:[%s5 + $0x3c8] sm:$0xff]
      %v1579 = vld [vmem:[%s5 + $0x3d0] sm:$0xff]
      %v1580 = vld [vmem:[%s5 + $0x3d8] sm:$0xff]
      %v1581 = vld [vmem:[%s5 + $0x3e0] sm:$0xff]
      %v1582 = vld [vmem:[%s5 + $0x3e8] sm:$0xff]
      %v1583 = vld [vmem:[%s5 + $0x3f0] sm:$0xff]
      %v1584 = vld [vmem:[%s5 + $0x3f8] sm:$0xff]
      %v1585 = vld [vmem:[%s5 + $0x400] sm:$0xff]
      %v1586 = vld [vmem:[%s5 + $0x408] sm:$0xff]
      %v1587 = vld [vmem:[%s5 + $0x410] sm:$0xff]
      %v1588 = vld [vmem:[%s5 + $0x418] sm:$0xff]
      %v1589 = vld [vmem:[%s5 + $0x420] sm:$0xff]
      %v1590 = vld [vmem:[%s5 + $0x428] sm:$0xff]
      %v1591 = vld [vmem:[%s5 + $0x430] sm:$0xff]
      %v1592 = vld [vmem:[%s5 + $0x438] sm:$0xff]
      %v1593 = vld [vmem:[%s5 + $0x440] sm:$0xff]
      %v1594 = vld [vmem:[%s5 + $0x448] sm:$0xff]
      %v1595 = vld [vmem:[%s5 + $0x450] sm:$0xff]
      %v1596 = vld [vmem:[%s5 + $0x458] sm:$0xff]
      %v1597 = vld [vmem:[%s5 + $0x460] sm:$0xff]
      %v1598 = vld [vmem:[%s5 + $0x468] sm:$0xff]
      %v1599 = vld [vmem:[%s5 + $0x470] sm:$0xff]
      %v1600 = vld [vmem:[%s5 + $0x478] sm:$0xff]
      %1601 = vmatprep.subr.mxu0 0.0
      %1602 = vmatpush1.msra.mxu0 %v1585
      %1603 = vmatprep.subr.mxu0 0.0
      %1604 = vmatpush1.msra.mxu0 %v1586
      %1605 = vmatprep.subr.mxu0 0.0
      %1606 = vmatpush1.msra.mxu0 %v1587
      %1607 = vmatprep.subr.mxu0 0.0
      %1608 = vmatpush1.msra.mxu0 %v1588
      %1609 = vmatprep.subr.mxu0 0.0
      %1610 = vmatpush1.msra.mxu0 %v1589
      %1611 = vmatprep.subr.mxu0 0.0
      %1612 = vmatpush1.msra.mxu0 %v1590
      %1613 = vmatprep.subr.mxu0 0.0
      %1614 = vmatpush1.msra.mxu0 %v1591
      %1615 = vmatprep.subr.mxu0 0.0
      %1616 = vmatpush1.msra.mxu0 %v1592
      %1617 = vmatprep.subr.mxu0 0.0
      %1618 = vmatpush1.msra.mxu0 %v1593
      %1619 = vmatprep.subr.mxu0 0.0
      %1620 = vmatpush1.msra.mxu0 %v1594
      %1621 = vmatprep.subr.mxu0 0.0
      %1622 = vmatpush1.msra.mxu0 %v1595
      %1623 = vmatprep.subr.mxu0 0.0
      %1624 = vmatpush1.msra.mxu0 %v1596
      %1625 = vmatprep.subr.mxu0 0.0
      %1626 = vmatpush1.msra.mxu0 %v1597
      %1627 = vmatprep.subr.mxu0 0.0
      %1628 = vmatpush1.msra.mxu0 %v1598
      %1629 = vmatprep.subr.mxu0 0.0
      %1630 = vmatpush1.msra.mxu0 %v1599
      %1631 = vmatprep.subr.mxu0 0.0
      %1632 = vmatpush1.msra.mxu0 %v1600
      %1633 = vmatprep.subr.mxu0 0.0
      %1634 = vmatpush1.msra.mxu0 0.0
      %1635 = vmatprep.subr.mxu0 0.0
      %1636 = vmatpush1.msra.mxu0 0.0
      %1637 = vmatprep.subr.mxu0 0.0
      %1638 = vmatpush1.msra.mxu0 0.0
      %1639 = vmatprep.subr.mxu0 0.0
      %1640 = vmatpush1.msra.mxu0 0.0
      %1641 = vmatprep.subr.mxu0 0.0
      %1642 = vmatpush1.msra.mxu0 0.0
      %1643 = vmatprep.subr.mxu0 0.0
      %1644 = vmatpush1.msra.mxu0 0.0
      %1645 = vmatprep.subr.mxu0 0.0
      %1646 = vmatpush1.msra.mxu0 0.0
      %1647 = vmatprep.subr.mxu0 0.0
      %1648 = vmatpush1.msra.mxu0 0.0
      %1649 = vmatprep.subr.mxu0 0.0
      %1650 = vmatpush1.msra.mxu0 0.0
      %1651 = vmatprep.subr.mxu0 0.0
      %1652 = vmatpush1.msra.mxu0 0.0
      %1653 = vmatprep.subr.mxu0 0.0
      %1654 = vmatpush1.msra.mxu0 0.0
      %1655 = vmatprep.subr.mxu0 0.0
      %1656 = vmatpush1.msra.mxu0 0.0
      %1657 = vmatprep.subr.mxu0 0.0
      %1658 = vmatpush1.msra.mxu0 0.0
      %1659 = vmatprep.subr.mxu0 0.0
      %1660 = vmatpush1.msra.mxu0 0.0
      %1661 = vmatprep.subr.mxu0 0.0
      %1662 = vmatpush1.msra.mxu0 0.0
      %1663 = vmatprep.subr.mxu0 0.0
      %1664 = vmatpush1.msra.mxu0 0.0
      %1665 = vmatprep.mubr.f32.mxu0 0.0
      %1666 = vmatmul.mubr.f32.gmra.mrb[0].mxu0 %v1567
      %v1667 = vpop.f32.mrb[0].mxu0
      %v1668 = vadd.f32 0.0, %v1667
      %v1669 = vpop.f32.mrb[0].mxu0
      %1670 = vmatprep.mubr.f32.mxu0 0.0
      %1671 = vmatmul.mubr.f32.gmra.mrb[0].mxu0 %v1568
      %v1672 = vpop.f32.mrb[0].mxu0
      %v1673 = vadd.f32 0.0, %v1672
      %v1674 = vpop.f32.mrb[0].mxu0
      %1675 = vdwg.mxu0
      %1676 = vmatprep.subr.mxu0 0.0
      %1677 = vmatpush1.msra.mxu0 %v1569
      %1678 = vmatprep.subr.mxu0 0.0
      %1679 = vmatpush1.msra.mxu0 %v1570
      %1680 = vmatprep.subr.mxu0 0.0
      %1681 = vmatpush1.msra.mxu0 %v1571
      %1682 = vmatprep.subr.mxu0 0.0
      %1683 = vmatpush1.msra.mxu0 %v1572
      %1684 = vmatprep.subr.mxu0 0.0
      %1685 = vmatpush1.msra.mxu0 %v1573
      %1686 = vmatprep.subr.mxu0 0.0
      %1687 = vmatpush1.msra.mxu0 %v1574
      %1688 = vmatprep.subr.mxu0 0.0
      %1689 = vmatpush1.msra.mxu0 %v1575
      %1690 = vmatprep.subr.mxu0 0.0
      %1691 = vmatpush1.msra.mxu0 %v1576
      %1692 = vmatprep.subr.mxu0 0.0
      %1693 = vmatpush1.msra.mxu0 %v1577
      %1694 = vmatprep.subr.mxu0 0.0
      %1695 = vmatpush1.msra.mxu0 %v1578
      %1696 = vmatprep.subr.mxu0 0.0
      %1697 = vmatpush1.msra.mxu0 %v1579
      %1698 = vmatprep.subr.mxu0 0.0
      %1699 = vmatpush1.msra.mxu0 %v1580
      %1700 = vmatprep.subr.mxu0 0.0
      %1701 = vmatpush1.msra.mxu0 %v1581
      %1702 = vmatprep.subr.mxu0 0.0
      %1703 = vmatpush1.msra.mxu0 %v1582
      %1704 = vmatprep.subr.mxu0 0.0
      %1705 = vmatpush1.msra.mxu0 %v1583
      %1706 = vmatprep.subr.mxu0 0.0
      %1707 = vmatpush1.msra.mxu0 %v1584
      %1708 = vmatprep.subr.mxu0 0.0
      %1709 = vmatpush1.msra.mxu0 0.0
      %1710 = vmatprep.subr.mxu0 0.0
      %1711 = vmatpush1.msra.mxu0 0.0
      %1712 = vmatprep.subr.mxu0 0.0
      %1713 = vmatpush1.msra.mxu0 0.0
      %1714 = vmatprep.subr.mxu0 0.0
      %1715 = vmatpush1.msra.mxu0 0.0
      %1716 = vmatprep.subr.mxu0 0.0
      %1717 = vmatpush1.msra.mxu0 0.0
      %1718 = vmatprep.subr.mxu0 0.0
      %1719 = vmatpush1.msra.mxu0 0.0
      %1720 = vmatprep.subr.mxu0 0.0
      %1721 = vmatpush1.msra.mxu0 0.0
      %1722 = vmatprep.subr.mxu0 0.0
      %1723 = vmatpush1.msra.mxu0 0.0
      %1724 = vmatprep.subr.mxu0 0.0
      %1725 = vmatpush1.msra.mxu0 0.0
      %1726 = vmatprep.subr.mxu0 0.0
      %1727 = vmatpush1.msra.mxu0 0.0
      %1728 = vmatprep.subr.mxu0 0.0
      %1729 = vmatpush1.msra.mxu0 0.0
      %1730 = vmatprep.subr.mxu0 0.0
      %1731 = vmatpush1.msra.mxu0 0.0
      %1732 = vmatprep.subr.mxu0 0.0
      %1733 = vmatpush1.msra.mxu0 0.0
      %1734 = vmatprep.subr.mxu0 0.0
      %1735 = vmatpush1.msra.mxu0 0.0
      %1736 = vmatprep.subr.mxu0 0.0
      %1737 = vmatpush1.msra.mxu0 0.0
      %1738 = vmatprep.subr.mxu0 0.0
      %1739 = vmatpush1.msra.mxu0 0.0
      %1740 = vmatprep.mubr.f32.mxu0 0.0
      %1741 = vmatmul.mubr.f32.gmra.mrb[0].mxu0 %v1468
      %v1742 = vpop.f32.mrb[0].mxu0
      %v1743 = vadd.f32 %v1668, %v1742
      %v1744 = vpop.f32.mrb[0].mxu0
      %1745 = vmatprep.mubr.f32.mxu0 0.0
      %1746 = vmatmul.mubr.f32.gmra.mrb[0].mxu0 %v1469
      %v1747 = vpop.f32.mrb[0].mxu0
      %v1748 = vadd.f32 %v1673, %v1747
      %v1749 = vpop.f32.mrb[0].mxu0
      %1750 = vdwg.mxu0
      %v1751 = vlaneseq
      %v1752 = vshrl.u32 %v1751, 7
      %v1753 = vsub.s32 2, %v1752
      %v1754 = vrot.slane %v1130, %v1753
      %v1755 = vadd.f32 %v1743, %v1754
      %v1756 = vadd.f32 %v1748, %v1754
      %v1757 = vmax.f32 %v1755, 0.0
      %v1758 = vmax.f32 %v1756, 0.0
      %v1759 = vlaneseq
      %v1760 = vshrl.u32 %v1759, 7
      %v1761 = vadd.s32 %v1760, 8
      %s1762 = smul.u32 %s36, 16
      %v1763 = vstv %s1762
      %v1764 = vadd.s32 %v1760, %v1763
      %v1765 = vadd.s32 %v1761, %v1763
      %s1766 = sld [smem:[#allocation5 + %s35]]
      %v1767 = vstv %s1766
      %vm1768 = vcmp.lt.s32.totalorder %v1764, %v1767
      %vm1769 = vcmp.lt.s32.totalorder %v1765, %v1767
      %s1770 = sld [smem:[#allocation6 + %s35]]
      %v1771 = vstv %s1770
      %v1772 = vsel %vm1768, %v1771, 0.0
      %v1773 = vsel %vm1769, %v1771, 0.0
      %v1774 = vld [vmem:[#allocation3] sm:$0x1]
      %v1775 = vmul.f32 %v1757, %v1772
      %v1776 = vmul.f32 %v1758, %v1773
      %v1777 = vadd.f32 %v1775, %v1776
      %v1778 = vrot.slane %v1777, 4
      %v1779 = vadd.f32 %v1777, %v1778
      %v1780 = vrot.slane %v1779, 2
      %v1781 = vadd.f32 %v1779, %v1780
      %v1782 = vrot.slane %v1781, 1
      %v1783 = vadd.f32 %v1781, %v1782
      %v1784 = vadd.f32 %v1774, %v1783
      %1785 = vst [vmem:[#allocation3] sm:$0x1] %v1784
      // Predicated region
      $region37: #{head_forward.1} parent=31 // pred_check
        %p1786 = pneg %p253
      $region38: #{head_forward.1} parent=31 // pred_check_branch
        %1788 = sbr.rel (%p1786) target = $region40
      $region39: #{head_forward.1} parent=31 // pred_region
        %v1789 = vld [vmem:[#allocation3] sm:$0x1]
        %v1790 = vld [vmem:[%s5 + $0x480] sm:$0xff]
        %v1791 = vld [vmem:[%s5 + $0x488] sm:$0xff]
        %v1792 = vld [vmem:[%s5 + $0x490] sm:$0xff]
        %v1793 = vld [vmem:[%s5 + $0x498] sm:$0xff]
        %v1794 = vld [vmem:[%s5 + $0x4a0] sm:$0xff]
        %v1795 = vld [vmem:[%s5 + $0x4a8] sm:$0xff]
        %v1796 = vld [vmem:[%s5 + $0x4b0] sm:$0xff]
        %v1797 = vld [vmem:[%s5 + $0x4b8] sm:$0xff]
        %v1798 = vld [vmem:[%s5 + $0x4c0] sm:$0xff]
        %v1799 = vld [vmem:[%s5 + $0x4c8] sm:$0xff]
        %v1800 = vld [vmem:[%s5 + $0x4d0] sm:$0xff]
        %v1801 = vld [vmem:[%s5 + $0x4d8] sm:$0xff]
        %v1802 = vld [vmem:[%s5 + $0x4e0] sm:$0xff]
        %v1803 = vld [vmem:[%s5 + $0x4e8] sm:$0xff]
        %v1804 = vld [vmem:[%s5 + $0x4f0] sm:$0xff]
        %v1805 = vld [vmem:[%s5 + $0x4f8] sm:$0xff]
        %v1807 = vrot.slane %v1130, 3
        %1809 = vmatprep.subr.mxu0 0.0
        %1810 = vmatpush1.msra.mxu0 %v1790
        %1811 = vmatprep.subr.mxu0 0.0
        %1812 = vmatpush1.msra.mxu0 %v1791
        %1813 = vmatprep.subr.mxu0 0.0
        %1814 = vmatpush1.msra.mxu0 %v1792
        %1815 = vmatprep.subr.mxu0 0.0
        %1816 = vmatpush1.msra.mxu0 %v1793
        %1817 = vmatprep.subr.mxu0 0.0
        %1818 = vmatpush1.msra.mxu0 %v1794
        %1819 = vmatprep.subr.mxu0 0.0
        %1820 = vmatpush1.msra.mxu0 %v1795
        %1821 = vmatprep.subr.mxu0 0.0
        %1822 = vmatpush1.msra.mxu0 %v1796
        %1823 = vmatprep.subr.mxu0 0.0
        %1824 = vmatpush1.msra.mxu0 %v1797
        %1825 = vmatprep.subr.mxu0 0.0
        %1826 = vmatpush1.msra.mxu0 %v1798
        %1827 = vmatprep.subr.mxu0 0.0
        %1828 = vmatpush1.msra.mxu0 %v1799
        %1829 = vmatprep.subr.mxu0 0.0
        %1830 = vmatpush1.msra.mxu0 %v1800
        %1831 = vmatprep.subr.mxu0 0.0
        %1832 = vmatpush1.msra.mxu0 %v1801
        %1833 = vmatprep.subr.mxu0 0.0
        %1834 = vmatpush1.msra.mxu0 %v1802
        %1835 = vmatprep.subr.mxu0 0.0
        %1836 = vmatpush1.msra.mxu0 %v1803
        %1837 = vmatprep.subr.mxu0 0.0
        %1838 = vmatpush1.msra.mxu0 %v1804
        %1839 = vmatprep.subr.mxu0 0.0
        %1840 = vmatpush1.msra.mxu0 %v1805
        %1841 = vmatprep.subr.mxu0 0.0
        %1842 = vmatpush1.msra.mxu0 0.0
        %1843 = vmatprep.subr.mxu0 0.0
        %1844 = vmatpush1.msra.mxu0 0.0
        %1845 = vmatprep.subr.mxu0 0.0
        %1846 = vmatpush1.msra.mxu0 0.0
        %1847 = vmatprep.subr.mxu0 0.0
        %1848 = vmatpush1.msra.mxu0 0.0
        %1849 = vmatprep.subr.mxu0 0.0
        %1850 = vmatpush1.msra.mxu0 0.0
        %1851 = vmatprep.subr.mxu0 0.0
        %1852 = vmatpush1.msra.mxu0 0.0
        %1853 = vmatprep.subr.mxu0 0.0
        %1854 = vmatpush1.msra.mxu0 0.0
        %1855 = vmatprep.subr.mxu0 0.0
        %1856 = vmatpush1.msra.mxu0 0.0
        %1857 = vmatprep.subr.mxu0 0.0
        %1858 = vmatpush1.msra.mxu0 0.0
        %1859 = vmatprep.subr.mxu0 0.0
        %1860 = vmatpush1.msra.mxu0 0.0
        %1861 = vmatprep.subr.mxu0 0.0
        %1862 = vmatpush1.msra.mxu0 0.0
        %1863 = vmatprep.subr.mxu0 0.0
        %1864 = vmatpush1.msra.mxu0 0.0
        %1865 = vmatprep.subr.mxu0 0.0
        %1866 = vmatpush1.msra.mxu0 0.0
        %1867 = vmatprep.subr.mxu0 0.0
        %1868 = vmatpush1.msra.mxu0 0.0
        %1869 = vmatprep.subr.mxu0 0.0
        %1870 = vmatpush1.msra.mxu0 0.0
        %1871 = vmatprep.subr.mxu0 0.0
        %1872 = vmatpush1.msra.mxu0 0.0
        %1873 = vmatprep.mubr.f32.mxu0 0.0
        %1874 = vmatmul.mubr.f32.gmra.mrb[0].mxu0 %v1789
        %v1875 = vpop.f32.mrb[0].mxu0
        %v1876 = vadd.f32 %v1807, %v1875
        %v1877 = vpop.f32.mrb[0].mxu0
        %1878 = vdwg.mxu0
        %v1879 = vlaneseq
        %v1880 = vshrl.u32 %v1879, 7
        %v1881 = vsub.s32 0, %v1880
        %v1882 = vrot.slane %v1876, %v1881
        %1883 = vst [vmem:[%s252] sm:$0xff] %v1882
      $region40: #{head_forward.1} parent=31 // pred_fallthru
        _
      %p1884 = scmp.lt.s32.totalorder %s35, 1
      %s1885 = scalar_select %p1884, %s35, 1
      %s1886 = smul.addr %s1885, 8
      %s1887 = scalar_lea.vmem %s6, %s1886
      // Predicated region
      $region41: #{head_forward.1} parent=31 // pred_check
        %p1888 = pneg %p138
      $region42: #{head_forward.1} parent=31 // pred_check_branch
        %1890 = sbr.rel (%p1888) target = $region44
      $region43: #{head_forward.1} parent=31 // pred_region
        _
      $region44: #{head_forward.1} parent=31 // pred_fallthru
        _
    $region32: #{head_forward.1} parent=5 // pred_fallthru
      _
    %p1891 = scmp.le.s32.totalorder 2, %s26
    // Predicated region
    $region45: #{head_forward.1} parent=5 // pred_check
      %p1892 = pneg %p1891
    $region46: #{head_forward.1} parent=5 // pred_check_branch
      %1894 = sbr.rel (%p1892) target = $region48
    $region47: #{head_forward.1} parent=5 // pred_region
      %s1895 = ssub.s32 %s26, 2
      // Predicated region
      $region49: #{head_forward.1} parent=47 // pred_check
        %p1896 = pneg %p144
      $region50: #{head_forward.1} parent=47 // pred_check_branch
        %1898 = sbr.rel (%p1896) target = $region52
      $region51: #{head_forward.1} parent=47 // pred_region
        %p1899 = scmp.lt.s32.totalorder %s37, 1
        %s1900 = scalar_select %p1899, %s37, 1
        %s1901 = smul.addr %s1900, 8
        %s1902 = scalar_lea.vmem %s6, %s1901
      $region52: #{head_forward.1} parent=47 // pred_fallthru
        _
    $region48: #{head_forward.1} parent=5 // pred_fallthru
      _
  $region6: #{head_forward.1} parent=0 // loop_footer
    %s30 = sadd.s32 1, %s26
  $region7: #{head_forward.1} parent=0 // loop_footer_branch
    %25 = sbr.rel target = $region3
  $region8: #{head_forward.1} parent=0 // loop_exit
    _

</llo_original>
